<compile_context>
chip_gen: v6e
topology: v6e:2x2x1
jax: 0.10.0
libtpu: 0.0.40
codegen_flags: <defaults>
</compile_context>

<pallas_src>
import functools
import math

import jax
import jax.numpy as jnp
from jax import lax
from jax.experimental import pallas as pl
from jax.experimental.pallas import tpu as pltpu


def _finish_tile(q_raw, ctx, wout_ref, bout_ref, g_ref, o_ref, *,
                 heads, dim_head, scale, eps, cdt):
    """q softmax (head-channel axis), out = ctx @ q, 1x1 out-conv + bias, LayerNorm."""
    D = dim_head
    hidden = heads * D
    tl = q_raw.shape[-1]

    # q: softmax over the head-channel axis; fold `scale` into the reciprocal.
    q = jnp.exp(q_raw - jnp.max(q_raw, axis=1, keepdims=True))
    q = q * (scale * pl.reciprocal(jnp.sum(q, axis=1, keepdims=True), approx=True))

    # out[h,e,n] = sum_d ctx[h,d,e] * q[h,d,n]   (batched over heads)
    out = jnp.einsum('hde,hdn->hen', ctx.astype(cdt), q.astype(cdt),
                     preferred_element_type=jnp.float32)
    out = out.reshape(hidden, tl)                      # free leading-dim merge, no concat

    # to_out[0]: 1x1 conv with bias (weight already lane-dense: (dim, hidden)).
    y = jnp.dot(wout_ref[...], out.astype(cdt), preferred_element_type=jnp.float32)
    y = y + bout_ref[...].astype(jnp.float32)

    # to_out[1]: channel-wise LayerNorm (unbiased=False), learned gain.
    mean = jnp.mean(y, axis=0, keepdims=True)
    var = jnp.mean((y - mean) * (y - mean), axis=0, keepdims=True)
    g = g_ref[0].astype(jnp.float32)
    o_ref[0] = ((y - mean) * lax.rsqrt(var + eps) * g).astype(o_ref.dtype)


def _linattn_full_kernel(x_ref, wqkv_t_ref, wout_ref, bout_ref, g_ref, o_ref,
                         *, heads, dim_head, scale, eps):
    """Whole-sequence slab per grid step (one batch element)."""
    D = dim_head
    hidden = heads * D
    x = x_ref[0]                                       # (dim, L), native dtype
    cdt = x.dtype
    L = x.shape[-1]

    # 1x1 conv (no bias): contract over channels; weight is lane-dense (dim, 3*hidden).
    qkv = lax.dot_general(wqkv_t_ref[...], x, (((0,), (0,)), ((), ())),
                          preferred_element_type=jnp.float32)       # (3*hidden, L)
    q = qkv[:hidden].reshape(heads, D, L)
    k = qkv[hidden:2 * hidden].reshape(heads, D, L)
    v = qkv[2 * hidden:].reshape(heads, D, L)

    # k: softmax over the sequence axis (lanes).
    k = jnp.exp(k - jnp.max(k, axis=2, keepdims=True))
    k = k * pl.reciprocal(jnp.sum(k, axis=2, keepdims=True), approx=True)

    # context[h,d,e] = sum_n k[h,d,n] * v[h,e,n]   (tiny (heads, D, D) result)
    ctx = jnp.einsum('hdn,hen->hde', k.astype(cdt), v.astype(cdt),
                     preferred_element_type=jnp.float32)

    _finish_tile(q, ctx, wout_ref, bout_ref, g_ref, o_ref,
                 heads=heads, dim_head=dim_head, scale=scale, eps=eps, cdt=cdt)


def _linattn_tiled_kernel(x_ref, wqkv_t_ref, wout_ref, bout_ref, g_ref, o_ref,
                          m_ref, l_ref, ctx_ref,
                          *, heads, dim_head, scale, eps):
    """L-tiled two-pass variant: grid=(B, phase, n_tiles)."""
    D = dim_head
    hidden = heads * D
    phase = pl.program_id(1)
    lidx = pl.program_id(2)

    x = x_ref[0]                                       # (dim, tile)
    cdt = x.dtype
    tl = x.shape[-1]

    @pl.when(phase == 0)
    def _pass_kv():
        # Online (flash-style) accumulation of the k-softmax statistics and the
        # tiny (heads, D, D) context over sequence tiles.
        @pl.when(lidx == 0)
        def _init():
            m_ref[...] = jnp.full_like(m_ref, -jnp.inf)
            l_ref[...] = jnp.zeros_like(l_ref)
            ctx_ref[...] = jnp.zeros_like(ctx_ref)

        kv = lax.dot_general(wqkv_t_ref[:, hidden:], x, (((0,), (0,)), ((), ())),
                             preferred_element_type=jnp.float32)     # (2*hidden, tile)
        k = kv[:hidden].reshape(heads, D, tl)
        v = kv[hidden:].reshape(heads, D, tl)

        m_prev = m_ref[...]
        m_new = jnp.maximum(m_prev, jnp.max(k, axis=2, keepdims=True))
        alpha = jnp.exp(m_prev - m_new)                               # (heads, D, 1)
        p = jnp.exp(k - m_new)                                        # (heads, D, tile)
        l_ref[...] = alpha * l_ref[...] + jnp.sum(p, axis=2, keepdims=True)
        ctx_ref[...] = alpha * ctx_ref[...] + jnp.einsum(
            'hdn,hen->hde', p.astype(cdt), v.astype(cdt),
            preferred_element_type=jnp.float32)
        m_ref[...] = m_new

    @pl.when(phase == 1)
    def _pass_out():
        q = lax.dot_general(wqkv_t_ref[:, :hidden], x, (((0,), (0,)), ((), ())),
                            preferred_element_type=jnp.float32).reshape(heads, D, tl)
        # Normalize the accumulated context by the k-softmax denominator.
        ctx = ctx_ref[...] * pl.reciprocal(l_ref[...], approx=True)
        _finish_tile(q, ctx, wout_ref, bout_ref, g_ref, o_ref,
                     heads=heads, dim_head=dim_head, scale=scale, eps=eps, cdt=cdt)


def linear_attention(x, w_qkv, w_out, b_out, g, *, heads=4, dim_head=32, seq_tile=None):
    """x: (B, dim, L); w_qkv: (3*hidden, dim); w_out: (dim, hidden); b_out: (dim,); g: (1, dim, 1)."""
    B, dim, L = x.shape
    hidden = heads * dim_head
    assert w_qkv.shape == (3 * hidden, dim)
    assert w_out.shape == (dim, hidden)
    assert b_out.shape == (dim,)
    assert g.shape == (1, dim, 1)

    scale = float(dim_head) ** -0.5
    eps = 1e-05 if x.dtype == jnp.float32 else 1e-03
    w_qkv_t = jnp.transpose(w_qkv)                     # (dim, 3*hidden): lane-dense weight
    b_out2 = b_out.reshape(dim, 1)
    itemsize = jnp.dtype(x.dtype).itemsize

    # Generation-aware VMEM ceiling (~25% headroom below physical capacity).
    try:
        phys_vmem = int(pltpu.get_tpu_info().vmem_capacity_bytes)
    except Exception:
        phys_vmem = 64 << 20                           # conservative (v7x-sized) fallback
    vmem_cap = max(32 << 20, (phys_vmem * 3) // 4)

    def vmem_needed(tile, tiled):
        io = 2 * 2 * dim * tile * itemsize                              # x/out blocks, 2 buffers each
        wts = 2 * (3 * hidden * dim + dim * hidden + 2 * dim) * itemsize
        interm = (7 * hidden + 4 * dim) * tile * 4                      # f32 temporaries
        scratch = heads * dim_head * (dim_head + 2) * 4 if tiled else 0
        return io + wts + interm + scratch + (2 << 20)

    # Choose between the whole-sequence single-pass kernel and the L-tiled two-pass one.
    if seq_tile is not None and seq_tile < L:
        tile = int(seq_tile)
        use_tiled = True
    elif vmem_needed(L, False) <= vmem_cap:
        tile = L
        use_tiled = False
    else:
        tile = 0
        for t in range((L // 128) * 128, 0, -128):
            if L % t == 0 and vmem_needed(t, True) <= vmem_cap:
                tile = t
                break
        use_tiled = tile > 0
        if not use_tiled:
            # TODO(synk): pad/mask streaming for huge sequences not a multiple of 128;
            # fall back to the whole-slab kernel and let the compiler manage spilling.
            tile = L
    if use_tiled:
        assert L % tile == 0 and tile % 128 == 0, (
            "sequence tile must divide L and be a multiple of 128")

    vmem_limit = int(min(max(vmem_needed(tile, use_tiled), 32 << 20), vmem_cap))

    flops = (2 * B * L * dim * 3 * hidden                        # qkv projection
             + 4 * B * heads * dim_head * dim_head * L           # context + out einsums
             + 2 * B * L * hidden * dim)                         # output projection
    transcendentals = 2 * B * hidden * L                         # softmax exps
    x_reads = 2 if use_tiled else 1
    bytes_accessed = ((x_reads + 1) * B * dim * L
                      + 3 * hidden * dim + dim * hidden + 2 * dim) * itemsize
    cost = pl.CostEstimate(flops=int(flops), transcendentals=int(transcendentals),
                           bytes_accessed=int(bytes_accessed))
    out_shape = jax.ShapeDtypeStruct((B, dim, L), x.dtype)

    if not use_tiled:
        kernel = functools.partial(_linattn_full_kernel, heads=heads, dim_head=dim_head,
                                   scale=scale, eps=eps)
        return pl.pallas_call(
            kernel,
            out_shape=out_shape,
            grid_spec=pltpu.PrefetchScalarGridSpec(
                num_scalar_prefetch=0,
                grid=(B,),
                in_specs=[
                    pl.BlockSpec((1, dim, L), lambda b: (b, 0, 0)),       # x slab (lane-dense in L)
                    pl.BlockSpec((dim, 3 * hidden), lambda b: (0, 0)),    # W_qkv^T (resident)
                    pl.BlockSpec((dim, hidden), lambda b: (0, 0)),        # W_out (resident)
                    pl.BlockSpec((dim, 1), lambda b: (0, 0)),             # out-conv bias
                    pl.BlockSpec((1, dim, 1), lambda b: (0, 0, 0)),       # LayerNorm gain
                ],
                out_specs=pl.BlockSpec((1, dim, L), lambda b: (b, 0, 0)),
            ),
            compiler_params=pltpu.CompilerParams(
                dimension_semantics=("parallel",),
                vmem_limit_bytes=vmem_limit,
            ),
            cost_estimate=cost,
        )(x, w_qkv_t, w_out, b_out2, g)

    n_tiles = L // tile
    kernel = functools.partial(_linattn_tiled_kernel, heads=heads, dim_head=dim_head,
                               scale=scale, eps=eps)
    return pl.pallas_call(
        kernel,
        out_shape=out_shape,
        grid_spec=pltpu.PrefetchScalarGridSpec(
            num_scalar_prefetch=0,
            grid=(B, 2, n_tiles),                      # (batch, phase, sequence tile)
            in_specs=[
                pl.BlockSpec((1, dim, tile), lambda b, p, l: (b, 0, l)),
                pl.BlockSpec((dim, 3 * hidden), lambda b, p, l: (0, 0)),
                pl.BlockSpec((dim, hidden), lambda b, p, l: (0, 0)),
                pl.BlockSpec((dim, 1), lambda b, p, l: (0, 0)),
                pl.BlockSpec((1, dim, 1), lambda b, p, l: (0, 0, 0)),
            ],
            # Phase 0 never writes; park the output window on tile 0 so the first real
            # write (phase 1, tile 0) reuses the same resident block (no spurious flush).
            out_specs=pl.BlockSpec((1, dim, tile), lambda b, p, l: (b, 0, p * l)),
            scratch_shapes=[
                pltpu.VMEM((heads, dim_head, 1), jnp.float32),            # running max (k)
                pltpu.VMEM((heads, dim_head, 1), jnp.float32),            # running sum (k)
                pltpu.VMEM((heads, dim_head, dim_head), jnp.float32),     # context accumulator
            ],
        ),
        compiler_params=pltpu.CompilerParams(
            dimension_semantics=("parallel", "arbitrary", "arbitrary"),
            vmem_limit_bytes=vmem_limit,
        ),
        cost_estimate=cost,
    )(x, w_qkv_t, w_out, b_out2, g)


def linear_attention_ref(x, w_qkv, w_out, b_out, g, *, heads, dim_head):
    """Pure-JAX reference matching the PyTorch module."""
    B, dim, L = x.shape
    hidden = heads * dim_head
    scale = dim_head ** (-0.5)
    hp = jax.lax.Precision.HIGHEST
    xf = x.astype(jnp.float32)

    qkv = jnp.einsum("oc,bcl->bol", w_qkv.astype(jnp.float32), xf, precision=hp)
    q, k, v = jnp.split(qkv, 3, axis=1)
    q = q.reshape(B, heads, dim_head, L)
    k = k.reshape(B, heads, dim_head, L)
    v = v.reshape(B, heads, dim_head, L)

    q = jax.nn.softmax(q, axis=-2) * scale
    k = jax.nn.softmax(k, axis=-1)

    context = jnp.einsum("bhdn,bhen->bhde", k, v, precision=hp)
    out = jnp.einsum("bhde,bhdn->bhen", context, q, precision=hp)
    out = out.reshape(B, hidden, L)

    y = jnp.einsum("oc,bcl->bol", w_out.astype(jnp.float32), out, precision=hp)
    y = y + b_out.reshape(1, dim, 1).astype(jnp.float32)

    eps = 1e-05 if x.dtype == jnp.float32 else 1e-03
    mean = jnp.mean(y, axis=1, keepdims=True)
    var = jnp.mean((y - mean) ** 2, axis=1, keepdims=True)
    return ((y - mean) * jax.lax.rsqrt(var + eps) * g.astype(jnp.float32)).astype(x.dtype)


if __name__ == "__main__":
    key = jax.random.PRNGKey(0)
    B, dim, L = 2, 32, 256
    heads, dim_head = 4, 32
    hidden = heads * dim_head

    kx, kq, kw, kb = jax.random.split(key, 4)
    x = jax.random.normal(kx, (B, dim, L), dtype=jnp.float32)
    w_qkv = jax.random.normal(kq, (3 * hidden, dim), dtype=jnp.float32) / math.sqrt(dim)
    w_out = jax.random.normal(kw, (dim, hidden), dtype=jnp.float32) / math.sqrt(hidden)
    b_out = 0.1 * jax.random.normal(kb, (dim,), dtype=jnp.float32)
    g = jnp.ones((1, dim, 1), dtype=jnp.float32)   # LayerNorm gain as initialized in the module

    ref = linear_attention_ref(x, w_qkv, w_out, b_out, g, heads=heads, dim_head=dim_head)

    # Whole-sequence single-pass path.
    out = linear_attention(x, w_qkv, w_out, b_out, g, heads=heads, dim_head=dim_head)
    out = jax.block_until_ready(out)
    assert out.shape == (B, dim, L)
    assert jnp.allclose(out, ref, atol=1e-2, rtol=1e-2), float(jnp.max(jnp.abs(out - ref)))

    # L-tiled two-pass (online k-softmax) path, forced for coverage.
    out_t = linear_attention(x, w_qkv, w_out, b_out, g, heads=heads, dim_head=dim_head,
                             seq_tile=128)
    out_t = jax.block_until_ready(out_t)
    assert jnp.allclose(out_t, ref, atol=1e-2, rtol=1e-2), float(jnp.max(jnp.abs(out_t - ref)))

    print("KERNEL_OK")
</pallas_src>

<mosaic_0001>
module attributes {stable_mosaic.version = 11 : i64} {
  func.func @_linattn_full_kernel(%arg0: i32, %arg1: memref<1x32x256xf32, #tpu.memory_space<vmem>>, %arg2: memref<32x384xf32, #tpu.memory_space<vmem>>, %arg3: memref<32x128xf32, #tpu.memory_space<vmem>>, %arg4: memref<32x1xf32, #tpu.memory_space<vmem>>, %arg5: memref<1x32x1xf32, #tpu.memory_space<vmem>>, %arg6: memref<1x32x256xf32, #tpu.memory_space<vmem>>) attributes {dimension_semantics = [#tpu.dimension_semantics<parallel>], iteration_bounds = array<i64: 2>, scalar_prefetch = 0 : i64, scratch_operands = 0 : i64, tpu.core_type = #tpu.core_type<tc>, window_params = [{transform_indices = @transform_0, window_bounds = array<i64: 1, 32, 256>}, {pipeline_mode = #tpu.pipeline_mode<synchronous>, transform_indices = @transform_1, window_bounds = array<i64: 32, 384>}, {pipeline_mode = #tpu.pipeline_mode<synchronous>, transform_indices = @transform_2, window_bounds = array<i64: 32, 128>}, {pipeline_mode = #tpu.pipeline_mode<synchronous>, transform_indices = @transform_3, window_bounds = array<i64: 32, 1>}, {pipeline_mode = #tpu.pipeline_mode<synchronous>, transform_indices = @transform_4, window_bounds = array<i64: 1, 32, 1>}, {transform_indices = @transform_5, window_bounds = array<i64: 1, 32, 256>}]} {
    %c0 = arith.constant 0 : index
    %c0_0 = arith.constant 0 : index
    %c0_1 = arith.constant 0 : index
    %0 = vector.load %arg1[%c0, %c0_0, %c0_1] : memref<1x32x256xf32, #tpu.memory_space<vmem>>, vector<1x32x256xf32>
    %1 = vector.shape_cast %0 : vector<1x32x256xf32> to vector<32x256xf32>
    %c0_2 = arith.constant 0 : index
    %c0_3 = arith.constant 0 : index
    %2 = vector.load %arg2[%c0_2, %c0_3] : memref<32x384xf32, #tpu.memory_space<vmem>>, vector<32x384xf32>
    %cst = arith.constant dense<0.000000e+00> : vector<384x256xf32>
    %3 = tpu.matmul %2, %1, %cst {dimension_numbers = #tpu.dot_dimension_numbers<[0], [0], [1], [1], [0, 1, 1, 1], [], []>} : vector<32x384xf32>, vector<32x256xf32>, vector<384x256xf32> -> vector<384x256xf32>
    %4 = vector.extract_strided_slice %3 {offsets = [0, 0], sizes = [128, 256], strides = [1, 1]} : vector<384x256xf32> to vector<128x256xf32>
    %5 = vector.shape_cast %4 : vector<128x256xf32> to vector<4x32x256xf32>
    %6 = vector.extract_strided_slice %3 {offsets = [128, 0], sizes = [128, 256], strides = [1, 1]} : vector<384x256xf32> to vector<128x256xf32>
    %7 = vector.shape_cast %6 : vector<128x256xf32> to vector<4x32x256xf32>
    %8 = vector.extract_strided_slice %3 {offsets = [256, 0], sizes = [128, 256], strides = [1, 1]} : vector<384x256xf32> to vector<128x256xf32>
    %9 = vector.shape_cast %8 : vector<128x256xf32> to vector<4x32x256xf32>
    %cst_4 = arith.constant dense<0xFF800000> : vector<4x32xf32>
    %10 = vector.multi_reduction <maximumf>, %7, %cst_4 [2] : vector<4x32x256xf32> to vector<4x32xf32>
    %11 = vector.shape_cast %10 : vector<4x32xf32> to vector<4x32x1xf32>
    %12 = vector.broadcast %11 : vector<4x32x1xf32> to vector<4x32x256xf32>
    %13 = arith.subf %7, %12 : vector<4x32x256xf32>
    %14 = math.exp %13 : vector<4x32x256xf32>
    %cst_5 = arith.constant dense<0.000000e+00> : vector<4x32xf32>
    %15 = vector.multi_reduction <add>, %14, %cst_5 [2] : vector<4x32x256xf32> to vector<4x32xf32>
    %16 = vector.shape_cast %15 : vector<4x32xf32> to vector<4x32x1xf32>
    %17 = tpu.reciprocal %16 {approx = true} : vector<4x32x1xf32> -> vector<4x32x1xf32>
    %18 = vector.broadcast %17 : vector<4x32x1xf32> to vector<4x32x256xf32>
    %19 = arith.mulf %14, %18 : vector<4x32x256xf32>
    "tpu.trace_start"() <{level = 10 : i32, message = "hdn,hen->hde"}> : () -> ()
    %cst_6 = arith.constant dense<0.000000e+00> : vector<4x32x32xf32>
    %20 = tpu.matmul %19, %9, %cst_6 {dimension_numbers = #tpu.dot_dimension_numbers<[2], [2], [1], [1], [0, 0, 0, 1, 1, 1], [0], [0]>} : vector<4x32x256xf32>, vector<4x32x256xf32>, vector<4x32x32xf32> -> vector<4x32x32xf32>
    "tpu.trace_stop"() : () -> ()
    %cst_7 = arith.constant dense<0xFF800000> : vector<4x256xf32>
    %21 = vector.multi_reduction <maximumf>, %5, %cst_7 [1] : vector<4x32x256xf32> to vector<4x256xf32>
    %22 = vector.shape_cast %21 : vector<4x256xf32> to vector<4x1x256xf32>
    %23 = vector.broadcast %22 : vector<4x1x256xf32> to vector<4x32x256xf32>
    %24 = arith.subf %5, %23 : vector<4x32x256xf32>
    %25 = math.exp %24 : vector<4x32x256xf32>
    %cst_8 = arith.constant dense<0.000000e+00> : vector<4x256xf32>
    %26 = vector.multi_reduction <add>, %25, %cst_8 [1] : vector<4x32x256xf32> to vector<4x256xf32>
    %27 = vector.shape_cast %26 : vector<4x256xf32> to vector<4x1x256xf32>
    %28 = tpu.reciprocal %27 {approx = true} : vector<4x1x256xf32> -> vector<4x1x256xf32>
    %cst_9 = arith.constant 0.176776692 : f32
    %29 = vector.broadcast %cst_9 : f32 to vector<4x1x256xf32>
    %30 = arith.mulf %29, %28 : vector<4x1x256xf32>
    %31 = vector.broadcast %30 : vector<4x1x256xf32> to vector<4x32x256xf32>
    %32 = arith.mulf %25, %31 : vector<4x32x256xf32>
    "tpu.trace_start"() <{level = 10 : i32, message = "hde,hdn->hen"}> : () -> ()
    %cst_10 = arith.constant dense<0.000000e+00> : vector<4x32x256xf32>
    %33 = tpu.matmul %20, %32, %cst_10 {dimension_numbers = #tpu.dot_dimension_numbers<[1], [1], [2], [2], [0, 0, 0, 2, 1, 2], [0], [0]>} : vector<4x32x32xf32>, vector<4x32x256xf32>, vector<4x32x256xf32> -> vector<4x32x256xf32>
    "tpu.trace_stop"() : () -> ()
    %34 = vector.shape_cast %33 : vector<4x32x256xf32> to vector<128x256xf32>
    %c0_11 = arith.constant 0 : index
    %c0_12 = arith.constant 0 : index
    %35 = vector.load %arg3[%c0_11, %c0_12] : memref<32x128xf32, #tpu.memory_space<vmem>>, vector<32x128xf32>
    %cst_13 = arith.constant dense<0.000000e+00> : vector<32x256xf32>
    %36 = tpu.matmul %35, %34, %cst_13 {dimension_numbers = #tpu.dot_dimension_numbers<[1], [0], [0], [1], [0, 0, 1, 1], [], []>} : vector<32x128xf32>, vector<128x256xf32>, vector<32x256xf32> -> vector<32x256xf32>
    %c0_14 = arith.constant 0 : index
    %c0_15 = arith.constant 0 : index
    %37 = vector.load %arg4[%c0_14, %c0_15] : memref<32x1xf32, #tpu.memory_space<vmem>>, vector<32x1xf32>
    %38 = vector.broadcast %37 : vector<32x1xf32> to vector<32x256xf32>
    %39 = arith.addf %36, %38 : vector<32x256xf32>
    %cst_16 = arith.constant dense<0.000000e+00> : vector<256xf32>
    %40 = vector.multi_reduction <add>, %39, %cst_16 [0] : vector<32x256xf32> to vector<256xf32>
    %41 = vector.shape_cast %40 : vector<256xf32> to vector<1x256xf32>
    %cst_17 = arith.constant 3.200000e+01 : f32
    %42 = vector.broadcast %cst_17 : f32 to vector<1x256xf32>
    %43 = arith.divf %41, %42 : vector<1x256xf32>
    %44 = vector.broadcast %43 : vector<1x256xf32> to vector<32x256xf32>
    %45 = arith.subf %39, %44 : vector<32x256xf32>
    %46 = vector.broadcast %43 : vector<1x256xf32> to vector<32x256xf32>
    %47 = arith.subf %39, %46 : vector<32x256xf32>
    %48 = arith.mulf %45, %47 : vector<32x256xf32>
    %cst_18 = arith.constant dense<0.000000e+00> : vector<256xf32>
    %49 = vector.multi_reduction <add>, %48, %cst_18 [0] : vector<32x256xf32> to vector<256xf32>
    %50 = vector.shape_cast %49 : vector<256xf32> to vector<1x256xf32>
    %cst_19 = arith.constant 3.200000e+01 : f32
    %51 = vector.broadcast %cst_19 : f32 to vector<1x256xf32>
    %52 = arith.divf %50, %51 : vector<1x256xf32>
    %c0_20 = arith.constant 0 : index
    %c0_21 = arith.constant 0 : index
    %c0_22 = arith.constant 0 : index
    %53 = vector.load %arg5[%c0_20, %c0_21, %c0_22] : memref<1x32x1xf32, #tpu.memory_space<vmem>>, vector<1x32x1xf32>
    %54 = vector.shape_cast %53 : vector<1x32x1xf32> to vector<32x1xf32>
    %55 = vector.broadcast %43 : vector<1x256xf32> to vector<32x256xf32>
    %56 = arith.subf %39, %55 : vector<32x256xf32>
    %cst_23 = arith.constant 9.99999974E-6 : f32
    %57 = vector.broadcast %cst_23 : f32 to vector<1x256xf32>
    %58 = arith.addf %52, %57 : vector<1x256xf32>
    %59 = math.rsqrt %58 : vector<1x256xf32>
    %60 = vector.broadcast %59 : vector<1x256xf32> to vector<32x256xf32>
    %61 = arith.mulf %56, %60 : vector<32x256xf32>
    %62 = vector.broadcast %54 : vector<32x1xf32> to vector<32x256xf32>
    %63 = arith.mulf %61, %62 : vector<32x256xf32>
    %c0_24 = arith.constant 0 : index
    %c0_25 = arith.constant 0 : index
    %c0_26 = arith.constant 0 : index
    %64 = vector.load %arg6[%c0_24, %c0_25, %c0_26] : memref<1x32x256xf32, #tpu.memory_space<vmem>>, vector<1x32x256xf32>
    %65 = vector.shape_cast %64 : vector<1x32x256xf32> to vector<32x256xf32>
    %66 = vector.shape_cast %63 : vector<32x256xf32> to vector<1x32x256xf32>
    tpu.vector_store %arg6[%c0_24, %c0_25, %c0_26], %66 {strides = array<i32>} : memref<1x32x256xf32, #tpu.memory_space<vmem>>, vector<1x32x256xf32>,
    return
  }
  func.func @transform_0(%arg0: i32) -> (i32, i32, i32) {
    %c0_i32 = arith.constant 0 : i32
    %c0_i32_0 = arith.constant 0 : i32
    %c0_i32_1 = arith.constant 0 : i32
    return %arg0, %c0_i32, %c0_i32_0 : i32, i32, i32
  }
  func.func @transform_1(%arg0: i32) -> (i32, i32) {
    %c0_i32 = arith.constant 0 : i32
    %c0_i32_0 = arith.constant 0 : i32
    %c0_i32_1 = arith.constant 0 : i32
    return %c0_i32, %c0_i32_0 : i32, i32
  }
  func.func @transform_2(%arg0: i32) -> (i32, i32) {
    %c0_i32 = arith.constant 0 : i32
    %c0_i32_0 = arith.constant 0 : i32
    %c0_i32_1 = arith.constant 0 : i32
    return %c0_i32, %c0_i32_0 : i32, i32
  }
  func.func @transform_3(%arg0: i32) -> (i32, i32) {
    %c0_i32 = arith.constant 0 : i32
    %c0_i32_0 = arith.constant 0 : i32
    %c0_i32_1 = arith.constant 0 : i32
    return %c0_i32, %c0_i32_0 : i32, i32
  }
  func.func @transform_4(%arg0: i32) -> (i32, i32, i32) {
    %c0_i32 = arith.constant 0 : i32
    %c0_i32_0 = arith.constant 0 : i32
    %c0_i32_1 = arith.constant 0 : i32
    %c0_i32_2 = arith.constant 0 : i32
    return %c0_i32, %c0_i32_0, %c0_i32_1 : i32, i32, i32
  }
  func.func @transform_5(%arg0: i32) -> (i32, i32, i32) {
    %c0_i32 = arith.constant 0 : i32
    %c0_i32_0 = arith.constant 0 : i32
    %c0_i32_1 = arith.constant 0 : i32
    return %arg0, %c0_i32, %c0_i32_0 : i32, i32, i32
  }
}

</mosaic_0001>

<llo_original>
// kernel: tpu_custom_call.1
$region0: #{tpu_custom_call.1}
  #allocation0 [shape = 'u32[]', space=smem, size = 0x4, offset = 0x4, fixed_abs, tag = 'smem constant byte address 0x4 - core index']
  #allocation1 [shape = 'u32[144,128]{1,0:T(1,128)}', space=vmem, size = 0x12000, scoped, tag = 'internal scratch']
  %s0 = inlined_call_operand.hbm [shape: f32[2,32,256], index: 0, kind: input, shape index: {}]
  %s1 = inlined_call_operand.hbm [shape: f32[32,384], index: 1, kind: input, shape index: {}]
  %s2 = inlined_call_operand.vmem [shape: f32[32,128], index: 2, kind: input, shape index: {}]
  %s3 = inlined_call_operand.vmem [shape: f32[32,1], index: 3, kind: input, shape index: {}]
  %s4 = inlined_call_operand.vmem [shape: f32[1,32,1], index: 4, kind: input, shape index: {}]
  %s5 = inlined_call_operand.hbm [shape: f32[2,32,256], index: 5, kind: output, shape index: {}]
  %s6 = sld [smem:[#allocation0]]
  $region61: #{tpu_custom_call.1} parent=0
    _
  %s8 = ssub.s32 1, %s6
  %s9 = scalar_select 0, %s8, %s6
  $region1: #{tpu_custom_call.1} parent=0
    #allocation2 [shape = 'u8[65536]{0}', space=vmem, size = 0x10000, scoped, tag = 'input window, operand 0']
    #allocation3 [shape = 's32[2]{0}', space=sflag, size = 0x8, scoped, tag = 'scoped memory for tpu_custom_call.1']
    #allocation4 [shape = 's32[2]{0}', space=sflag, size = 0x8, scoped, tag = 'scoped memory for tpu_custom_call.1']
    #allocation5 [shape = 'u8[49152]{0}', space=vmem, size = 0xc000, scoped, tag = 'input window, operand 1, single buffered']
    #allocation6 [shape = 's32[1]{0}', space=sflag, size = 0x4, scoped, tag = 'scoped memory for tpu_custom_call.1']
    #allocation7 [shape = 'u8[65536]{0}', space=vmem, size = 0x10000, scoped, tag = 'output window, operand 0']
    %10 = vsyncpa [#allocation3], 0
    %s11 = scalar_lea.sflag [#allocation3], 1
    %12 = vsyncpa %s11, 0
    %13 = vsyncpa [#allocation6], 0
    %14 = vsyncpa [#allocation4], 0
    %s15 = scalar_lea.sflag [#allocation4], 1
    %16 = vsyncpa %s15, 0
    loop: start=0, step=1, limit=4
    $region2: #{tpu_custom_call.1} parent=1 // loop_pre_header
      _
    $region3: #{tpu_custom_call.1} parent=1 // loop_header
      %s18 = sphi 0, %s22
      %p19 = scmp.ge.s32.totalorder %s18, 4
      %s28 = sphi 0, %s30
      %s31 = sphi 0, %s28
      %s32 = sphi 0, %s31
      %s48 = sphi 0, %s32
      %s52 = sphi 0, %s52
      %s54 = sphi 0, %s52
      %s55 = sphi 0, %s54
      %s69 = sphi 0, %s55
      %s73 = sphi 0, %s73
      %s75 = sphi 0, %s73
      %s76 = sphi 0, %s75
      %s90 = sphi 0, %s76
      %s94 = sphi 0, %s94
      %s96 = sphi 0, %s94
      %s97 = sphi 0, %s96
      %s111 = sphi 0, %s97
      %s115 = sphi 0, %s115
      %s117 = sphi 0, %s115
      %s118 = sphi 0, %s117
      %s132 = sphi 0, %s118
      %s138 = sphi 0, %s140
      %s141 = sphi 0, %s138
      %s142 = sphi 0, %s141
      %s158 = sphi 0, %s142
    $region4: #{tpu_custom_call.1} parent=1 // loop_header_branch
      %21 = sbr.rel (%p19) target = $region8
    $region5: #{tpu_custom_call.1} parent=1 // loop_body
      %s23 = ssub.s32 %s18, 1
      %s24 = ssub.s32 %s18, 2
      %s25 = sadd.s32 %s18, 1
      %s26 = ssub.s32 %s18, %s25
      %p27 = scmp.eq.s32.totalorder %s26, 0
      %s29 = sadd.s32 %s28, 1
      %s30 = scalar_select %p27, %s28, %s29
      %p33 = pneg %p27
      %p34 = scmp.eq.s32.totalorder %s18, 1
      %p35 = por %p33, %p34
      %p36 = scmp.ne.s32.totalorder %s28, %s31
      %p37 = scmp.eq.s32.totalorder %s18, 0
      %p38 = por %p36, %p37
      %p39 = scmp.ne.s32.totalorder %s28, %s31
      %p40 = scmp.eq.s32.totalorder %s23, 1
      %p41 = por %p39, %p40
      %p42 = scmp.ne.s32.totalorder %s31, %s32
      %p43 = scmp.eq.s32.totalorder %s23, 0
      %p44 = por %p42, %p43
      %p45 = scmp.ne.s32.totalorder %s31, %s32
      %p46 = scmp.eq.s32.totalorder %s24, 1
      %p47 = por %p45, %p46
      %p49 = scmp.ne.s32.totalorder %s32, %s48
      %p50 = scmp.eq.s32.totalorder %s24, 0
      %p51 = por %p49, %p50
      %s53 = sadd.s32 %s52, 1
      %p56 = scmp.eq.s32.totalorder %s18, 1
      %p57 = scmp.ne.s32.totalorder %s52, %s54
      %p58 = scmp.eq.s32.totalorder %s18, 0
      %p59 = por %p57, %p58
      %p60 = scmp.ne.s32.totalorder %s52, %s54
      %p61 = scmp.eq.s32.totalorder %s23, 1
      %p62 = por %p60, %p61
      %p63 = scmp.ne.s32.totalorder %s54, %s55
      %p64 = scmp.eq.s32.totalorder %s23, 0
      %p65 = por %p63, %p64
      %p66 = scmp.ne.s32.totalorder %s54, %s55
      %p67 = scmp.eq.s32.totalorder %s24, 1
      %p68 = por %p66, %p67
      %p70 = scmp.ne.s32.totalorder %s55, %s69
      %p71 = scmp.eq.s32.totalorder %s24, 0
      %p72 = por %p70, %p71
      %s74 = sadd.s32 %s73, 1
      %p77 = scmp.eq.s32.totalorder %s18, 1
      %p78 = scmp.ne.s32.totalorder %s73, %s75
      %p79 = scmp.eq.s32.totalorder %s18, 0
      %p80 = por %p78, %p79
      %p81 = scmp.ne.s32.totalorder %s73, %s75
      %p82 = scmp.eq.s32.totalorder %s23, 1
      %p83 = por %p81, %p82
      %p84 = scmp.ne.s32.totalorder %s75, %s76
      %p85 = scmp.eq.s32.totalorder %s23, 0
      %p86 = por %p84, %p85
      %p87 = scmp.ne.s32.totalorder %s75, %s76
      %p88 = scmp.eq.s32.totalorder %s24, 1
      %p89 = por %p87, %p88
      %p91 = scmp.ne.s32.totalorder %s76, %s90
      %p92 = scmp.eq.s32.totalorder %s24, 0
      %p93 = por %p91, %p92
      %s95 = sadd.s32 %s94, 1
      %p98 = scmp.eq.s32.totalorder %s18, 1
      %p99 = scmp.ne.s32.totalorder %s94, %s96
      %p100 = scmp.eq.s32.totalorder %s18, 0
      %p101 = por %p99, %p100
      %p102 = scmp.ne.s32.totalorder %s94, %s96
      %p103 = scmp.eq.s32.totalorder %s23, 1
      %p104 = por %p102, %p103
      %p105 = scmp.ne.s32.totalorder %s96, %s97
      %p106 = scmp.eq.s32.totalorder %s23, 0
      %p107 = por %p105, %p106
      %p108 = scmp.ne.s32.totalorder %s96, %s97
      %p109 = scmp.eq.s32.totalorder %s24, 1
      %p110 = por %p108, %p109
      %p112 = scmp.ne.s32.totalorder %s97, %s111
      %p113 = scmp.eq.s32.totalorder %s24, 0
      %p114 = por %p112, %p113
      %s116 = sadd.s32 %s115, 1
      %p119 = scmp.eq.s32.totalorder %s18, 1
      %p120 = scmp.ne.s32.totalorder %s115, %s117
      %p121 = scmp.eq.s32.totalorder %s18, 0
      %p122 = por %p120, %p121
      %p123 = scmp.ne.s32.totalorder %s115, %s117
      %p124 = scmp.eq.s32.totalorder %s23, 1
      %p125 = por %p123, %p124
      %p126 = scmp.ne.s32.totalorder %s117, %s118
      %p127 = scmp.eq.s32.totalorder %s23, 0
      %p128 = por %p126, %p127
      %p129 = scmp.ne.s32.totalorder %s117, %s118
      %p130 = scmp.eq.s32.totalorder %s24, 1
      %p131 = por %p129, %p130
      %p133 = scmp.ne.s32.totalorder %s118, %s132
      %p134 = scmp.eq.s32.totalorder %s24, 0
      %p135 = por %p133, %p134
      %s136 = ssub.s32 %s18, %s25
      %p137 = scmp.eq.s32.totalorder %s136, 0
      %s139 = sadd.s32 %s138, 1
      %s140 = scalar_select %p137, %s138, %s139
      %p143 = pneg %p137
      %p144 = scmp.eq.s32.totalorder %s18, 1
      %p145 = por %p143, %p144
      %p146 = scmp.ne.s32.totalorder %s138, %s141
      %p147 = scmp.eq.s32.totalorder %s18, 0
      %p148 = por %p146, %p147
      %p149 = scmp.ne.s32.totalorder %s138, %s141
      %p150 = scmp.eq.s32.totalorder %s23, 1
      %p151 = por %p149, %p150
      %p152 = scmp.ne.s32.totalorder %s141, %s142
      %p153 = scmp.eq.s32.totalorder %s23, 0
      %p154 = por %p152, %p153
      %p155 = scmp.ne.s32.totalorder %s141, %s142
      %p156 = scmp.eq.s32.totalorder %s24, 1
      %p157 = por %p155, %p156
      %p159 = scmp.ne.s32.totalorder %s142, %s158
      %p160 = scmp.eq.s32.totalorder %s24, 0
      %p161 = por %p159, %p160
      %p162 = scmp.le.s32.totalorder 1, %s18
      %p163 = scmp.lt.s32.totalorder %s18, 3
      %p164 = pnand %p162, %p163
      %p165 = pneg %p164
      // Predicated region
      $region9: #{tpu_custom_call.1} parent=5 // pred_check
        _
      $region10: #{tpu_custom_call.1} parent=5 // pred_check_branch
        %167 = sbr.rel (%p164) target = $region12
      $region11: #{tpu_custom_call.1} parent=5 // pred_region
        %s168 = ssub.s32 %s18, 1
        // Predicated region
        $region13: #{tpu_custom_call.1} parent=11 // pred_check
          %p169 = pneg %p65
        $region14: #{tpu_custom_call.1} parent=11 // pred_check_branch
          %171 = sbr.rel (%p169) target = $region16
        $region15: #{tpu_custom_call.1} parent=11 // pred_region
          %s173 = ssub.s32 1536, 1536
          %174 = vsyncadd [#allocation6], %s173
          %s175 = sshll.u32 [#allocation5], 4
          %s176 = int_to_ptr.vmem [resolvable:$true] %s175
          %181 = dma.hbm_to_vmem [thread:$0]  %s1, 1536, %s176, [#allocation6], 384, 384, 24
        $region16: #{tpu_custom_call.1} parent=11 // pred_fallthru
          _
        // Predicated region
        $region17: #{tpu_custom_call.1} parent=11 // pred_check
          %p182 = pneg %p86
        $region18: #{tpu_custom_call.1} parent=11 // pred_check_branch
          %184 = sbr.rel (%p182) target = $region20
        $region19: #{tpu_custom_call.1} parent=11 // pred_region
          _
        $region20: #{tpu_custom_call.1} parent=11 // pred_fallthru
          _
        // Predicated region
        $region21: #{tpu_custom_call.1} parent=11 // pred_check
          %p185 = pneg %p107
        $region22: #{tpu_custom_call.1} parent=11 // pred_check_branch
          %187 = sbr.rel (%p185) target = $region24
        $region23: #{tpu_custom_call.1} parent=11 // pred_region
          _
        $region24: #{tpu_custom_call.1} parent=11 // pred_fallthru
          _
        // Predicated region
        $region25: #{tpu_custom_call.1} parent=11 // pred_check
          %p188 = pneg %p128
        $region26: #{tpu_custom_call.1} parent=11 // pred_check_branch
          %190 = sbr.rel (%p188) target = $region28
        $region27: #{tpu_custom_call.1} parent=11 // pred_region
          _
        $region28: #{tpu_custom_call.1} parent=11 // pred_fallthru
          _
      $region12: #{tpu_custom_call.1} parent=5 // pred_fallthru
        _
      %p191 = scmp.lt.s32.totalorder %s18, 2
      // Predicated region
      $region29: #{tpu_custom_call.1} parent=5 // pred_check
        %p192 = pneg %p191
      $region30: #{tpu_custom_call.1} parent=5 // pred_check_branch
        %194 = sbr.rel (%p192) target = $region32
      $region31: #{tpu_custom_call.1} parent=5 // pred_region
        // Predicated region
        $region33: #{tpu_custom_call.1} parent=31 // pred_check
          %p195 = pneg %p38
        $region34: #{tpu_custom_call.1} parent=31 // pred_check_branch
          %197 = sbr.rel (%p195) target = $region36
        $region35: #{tpu_custom_call.1} parent=31 // pred_region
          %s198 = sand.u32 %s28, 1
          %s199 = scalar_lea.sflag [#allocation3], %s198
          %s200 = sand.u32 %s28, 1
          %s201 = smul.addr %s200, 64
          %s202 = scalar_lea.vmem [#allocation2], %s201
          %s204 = ssub.s32 1024, 1024
          %205 = vsyncadd %s199, %s204
          %s206 = smul.addr %s18, 8
          %s207 = smul.addr %s206, 128
          %s208 = scalar_lea.hbm %s0, %s207
          %s209 = sshll.u32 %s202, 4
          %s210 = int_to_ptr.vmem [resolvable:$true] %s209
          %215 = dma.hbm_to_vmem [thread:$0]  %s208, 1024, %s210, %s199, 256, 256, 16
        $region36: #{tpu_custom_call.1} parent=31 // pred_fallthru
          _
      $region32: #{tpu_custom_call.1} parent=5 // pred_fallthru
        _
      %p216 = scmp.le.s32.totalorder 1, %s18
      %p217 = scmp.lt.s32.totalorder %s18, 3
      %p218 = pnand %p216, %p217
      %p219 = pneg %p218
      // Predicated region
      $region37: #{tpu_custom_call.1} parent=5 // pred_check
        _
      $region38: #{tpu_custom_call.1} parent=5 // pred_check_branch
        %221 = sbr.rel (%p218) target = $region40
      $region39: #{tpu_custom_call.1} parent=5 // pred_region
        %s222 = ssub.s32 %s18, 1
        %s223 = sand.u32 %s31, 1
        %s224 = scalar_lea.sflag [#allocation3], %s223
        %s225 = sand.u32 %s31, 1
        %s226 = smul.addr %s225, 64
        %s227 = scalar_lea.vmem [#allocation2], %s226
        // Predicated region
        $region41: #{tpu_custom_call.1} parent=39 // pred_check
          %p228 = pneg %p44
        $region42: #{tpu_custom_call.1} parent=39 // pred_check_branch
          %230 = sbr.rel (%p228) target = $region44
        $region43: #{tpu_custom_call.1} parent=39 // pred_region
          %231 = dma.done %s224, 1024
        $region44: #{tpu_custom_call.1} parent=39 // pred_fallthru
          _
        // Predicated region
        $region45: #{tpu_custom_call.1} parent=39 // pred_check
          %p232 = pneg %p65
        $region46: #{tpu_custom_call.1} parent=39 // pred_check_branch
          %234 = sbr.rel (%p232) target = $region48
        $region47: #{tpu_custom_call.1} parent=39 // pred_region
          %235 = dma.done [#allocation6], 1536
        $region48: #{tpu_custom_call.1} parent=39 // pred_fallthru
          _
        %s236 = sand.u32 %s31, 1
        %s237 = scalar_lea.sflag [#allocation3], %s236
        %s238 = sand.u32 %s31, 1
        %s239 = smul.addr %s238, 64
        %s240 = scalar_lea.vmem [#allocation2], %s239
        %p241 = pneg %p44
        %p242 = pneg %p41
        %p243 = pneg %p65
        %p244 = pneg %p62
        %p245 = pneg %p86
        %p246 = pneg %p83
        %p247 = pneg %p107
        %p248 = pneg %p104
        %p249 = pneg %p128
        %p250 = pneg %p125
        %p251 = pneg %p154
        %p252 = pneg %p151
        %s253 = sand.u32 %s141, 1
        %s254 = scalar_lea.sflag [#allocation4], %s253
        %s255 = sand.u32 %s141, 1
        %s256 = smul.addr %s255, 64
        %s257 = scalar_lea.vmem [#allocation7], %s256
        %v258 = vld [vmem:[%s227] sm:$0xff]
        %v259 = vld [vmem:[%s227 + $0x8] sm:$0xff]
        %v260 = vld [vmem:[%s227 + $0x10] sm:$0xff]
        %v261 = vld [vmem:[%s227 + $0x18] sm:$0xff]
        %v262 = vld [vmem:[%s227 + $0x20] sm:$0xff]
        %v263 = vld [vmem:[%s227 + $0x28] sm:$0xff]
        %v264 = vld [vmem:[%s227 + $0x30] sm:$0xff]
        %v265 = vld [vmem:[%s227 + $0x38] sm:$0xff]
        %v266 = vld [vmem:[#allocation5] sm:$0xff]
        %v267 = vld [vmem:[#allocation5 + $0x8] sm:$0xff]
        %v268 = vld [vmem:[#allocation5 + $0x10] sm:$0xff]
        %v269 = vld [vmem:[#allocation5 + $0x18] sm:$0xff]
        %v270 = vld [vmem:[#allocation5 + $0x20] sm:$0xff]
        %v271 = vld [vmem:[#allocation5 + $0x28] sm:$0xff]
        %v272 = vld [vmem:[#allocation5 + $0x30] sm:$0xff]
        %v273 = vld [vmem:[#allocation5 + $0x38] sm:$0xff]
        %v274 = vld [vmem:[#allocation5 + $0x40] sm:$0xff]
        %v275 = vld [vmem:[#allocation5 + $0x48] sm:$0xff]
        %v276 = vld [vmem:[#allocation5 + $0x50] sm:$0xff]
        %v277 = vld [vmem:[#allocation5 + $0x58] sm:$0xff]
        %278 = vxpose.xlu0.b32.start [1/16] %v266, 128
        %279 = vxpose.xlu0.b32.cont [2/16] %v269, 128
        %280 = vxpose.xlu0.b32.cont [3/16] %v272, 128
        %281 = vxpose.xlu0.b32.cont [4/16] %v275, 128
        %282 = vxpose.xlu0.b32.cont [5/16] 0.0, 128
        %283 = vxpose.xlu0.b32.cont [6/16] 0.0, 128
        %284 = vxpose.xlu0.b32.cont [7/16] 0.0, 128
        %285 = vxpose.xlu0.b32.cont [8/16] 0.0, 128
        %286 = vxpose.xlu0.b32.cont [9/16] 0.0, 128
        %287 = vxpose.xlu0.b32.cont [10/16] 0.0, 128
        %288 = vxpose.xlu0.b32.cont [11/16] 0.0, 128
        %289 = vxpose.xlu0.b32.cont [12/16] 0.0, 128
        %290 = vxpose.xlu0.b32.cont [13/16] 0.0, 128
        %291 = vxpose.xlu0.b32.cont [14/16] 0.0, 128
        %292 = vxpose.xlu0.b32.cont [15/16] 0.0, 128
        %293 = vxpose.xlu0.b32.end [16/16] 0.0, 128
        %v294 = vpop.trf.xlu0
        %v295 = vpop.trf.xlu0
        %v296 = vpop.trf.xlu0
        %v297 = vpop.trf.xlu0
        %v298 = vpop.trf.xlu0
        %v299 = vpop.trf.xlu0
        %v300 = vpop.trf.xlu0
        %v301 = vpop.trf.xlu0
        %v302 = vpop.trf.xlu0
        %v303 = vpop.trf.xlu0
        %v304 = vpop.trf.xlu0
        %v305 = vpop.trf.xlu0
        %v306 = vpop.trf.xlu0
        %v307 = vpop.trf.xlu0
        %v308 = vpop.trf.xlu0
        %v309 = vpop.trf.xlu0
        %310 = vxpose.xlu0.b32.start [1/16] %v267, 128
        %311 = vxpose.xlu0.b32.cont [2/16] %v270, 128
        %312 = vxpose.xlu0.b32.cont [3/16] %v273, 128
        %313 = vxpose.xlu0.b32.cont [4/16] %v276, 128
        %314 = vxpose.xlu0.b32.cont [5/16] 0.0, 128
        %315 = vxpose.xlu0.b32.cont [6/16] 0.0, 128
        %316 = vxpose.xlu0.b32.cont [7/16] 0.0, 128
        %317 = vxpose.xlu0.b32.cont [8/16] 0.0, 128
        %318 = vxpose.xlu0.b32.cont [9/16] 0.0, 128
        %319 = vxpose.xlu0.b32.cont [10/16] 0.0, 128
        %320 = vxpose.xlu0.b32.cont [11/16] 0.0, 128
        %321 = vxpose.xlu0.b32.cont [12/16] 0.0, 128
        %322 = vxpose.xlu0.b32.cont [13/16] 0.0, 128
        %323 = vxpose.xlu0.b32.cont [14/16] 0.0, 128
        %324 = vxpose.xlu0.b32.cont [15/16] 0.0, 128
        %325 = vxpose.xlu0.b32.end [16/16] 0.0, 128
        %v326 = vpop.trf.xlu0
        %v327 = vpop.trf.xlu0
        %v328 = vpop.trf.xlu0
        %v329 = vpop.trf.xlu0
        %v330 = vpop.trf.xlu0
        %v331 = vpop.trf.xlu0
        %v332 = vpop.trf.xlu0
        %v333 = vpop.trf.xlu0
        %v334 = vpop.trf.xlu0
        %v335 = vpop.trf.xlu0
        %v336 = vpop.trf.xlu0
        %v337 = vpop.trf.xlu0
        %v338 = vpop.trf.xlu0
        %v339 = vpop.trf.xlu0
        %v340 = vpop.trf.xlu0
        %v341 = vpop.trf.xlu0
        %342 = vxpose.xlu0.b32.start [1/16] %v268, 128
        %343 = vxpose.xlu0.b32.cont [2/16] %v271, 128
        %344 = vxpose.xlu0.b32.cont [3/16] %v274, 128
        %345 = vxpose.xlu0.b32.cont [4/16] %v277, 128
        %346 = vxpose.xlu0.b32.cont [5/16] 0.0, 128
        %347 = vxpose.xlu0.b32.cont [6/16] 0.0, 128
        %348 = vxpose.xlu0.b32.cont [7/16] 0.0, 128
        %349 = vxpose.xlu0.b32.cont [8/16] 0.0, 128
        %350 = vxpose.xlu0.b32.cont [9/16] 0.0, 128
        %351 = vxpose.xlu0.b32.cont [10/16] 0.0, 128
        %352 = vxpose.xlu0.b32.cont [11/16] 0.0, 128
        %353 = vxpose.xlu0.b32.cont [12/16] 0.0, 128
        %354 = vxpose.xlu0.b32.cont [13/16] 0.0, 128
        %355 = vxpose.xlu0.b32.cont [14/16] 0.0, 128
        %356 = vxpose.xlu0.b32.cont [15/16] 0.0, 128
        %357 = vxpose.xlu0.b32.end [16/16] 0.0, 128
        %v358 = vpop.trf.xlu0
        %v359 = vpop.trf.xlu0
        %v360 = vpop.trf.xlu0
        %v361 = vpop.trf.xlu0
        %v362 = vpop.trf.xlu0
        %v363 = vpop.trf.xlu0
        %v364 = vpop.trf.xlu0
        %v365 = vpop.trf.xlu0
        %v366 = vpop.trf.xlu0
        %v367 = vpop.trf.xlu0
        %v368 = vpop.trf.xlu0
        %v369 = vpop.trf.xlu0
        %v370 = vpop.trf.xlu0
        %v371 = vpop.trf.xlu0
        %v372 = vpop.trf.xlu0
        %v373 = vpop.trf.xlu0
        %vm374 = vcmask 261120
        %v376 = vsel %vm374, %v294, 0
        %v379 = vsel %vm374, %v295, 0
        %v382 = vsel %vm374, %v296, 0
        %v385 = vsel %vm374, %v297, 0
        %v388 = vsel %vm374, %v298, 0
        %v391 = vsel %vm374, %v299, 0
        %v394 = vsel %vm374, %v300, 0
        %v397 = vsel %vm374, %v301, 0
        %v400 = vsel %vm374, %v302, 0
        %v403 = vsel %vm374, %v303, 0
        %v406 = vsel %vm374, %v304, 0
        %v409 = vsel %vm374, %v305, 0
        %v412 = vsel %vm374, %v306, 0
        %v415 = vsel %vm374, %v307, 0
        %v418 = vsel %vm374, %v308, 0
        %v421 = vsel %vm374, %v309, 0
        %v424 = vsel %vm374, %v326, 0
        %v427 = vsel %vm374, %v327, 0
        %v430 = vsel %vm374, %v328, 0
        %v433 = vsel %vm374, %v329, 0
        %v436 = vsel %vm374, %v330, 0
        %v439 = vsel %vm374, %v331, 0
        %v442 = vsel %vm374, %v332, 0
        %v445 = vsel %vm374, %v333, 0
        %v448 = vsel %vm374, %v334, 0
        %v451 = vsel %vm374, %v335, 0
        %v454 = vsel %vm374, %v336, 0
        %v457 = vsel %vm374, %v337, 0
        %v460 = vsel %vm374, %v338, 0
        %v463 = vsel %vm374, %v339, 0
        %v466 = vsel %vm374, %v340, 0
        %v469 = vsel %vm374, %v341, 0
        %v472 = vsel %vm374, %v358, 0
        %v475 = vsel %vm374, %v359, 0
        %v478 = vsel %vm374, %v360, 0
        %v481 = vsel %vm374, %v361, 0
        %v484 = vsel %vm374, %v362, 0
        %v487 = vsel %vm374, %v363, 0
        %v490 = vsel %vm374, %v364, 0
        %v493 = vsel %vm374, %v365, 0
        %v496 = vsel %vm374, %v366, 0
        %v499 = vsel %vm374, %v367, 0
        %v502 = vsel %vm374, %v368, 0
        %v505 = vsel %vm374, %v369, 0
        %v508 = vsel %vm374, %v370, 0
        %v511 = vsel %vm374, %v371, 0
        %v514 = vsel %vm374, %v372, 0
        %v517 = vsel %vm374, %v373, 0
        %519 = vmatprep.subr.mxu0 0.0
        %520 = vmatpush1.msra.mxu0 0.0
        %521 = vmatprep.subr.mxu0 0.0
        %522 = vmatpush1.msra.mxu0 0.0
        %523 = vmatprep.subr.mxu0 0.0
        %524 = vmatpush1.msra.mxu0 0.0
        %525 = vmatprep.subr.mxu0 0.0
        %526 = vmatpush1.msra.mxu0 0.0
        %527 = vmatprep.subr.mxu0 0.0
        %528 = vmatpush1.msra.mxu0 0.0
        %529 = vmatprep.subr.mxu0 0.0
        %530 = vmatpush1.msra.mxu0 0.0
        %531 = vmatprep.subr.mxu0 0.0
        %532 = vmatpush1.msra.mxu0 0.0
        %533 = vmatprep.subr.mxu0 0.0
        %534 = vmatpush1.msra.mxu0 0.0
        %535 = vmatprep.subr.mxu0 0.0
        %536 = vmatpush1.msra.mxu0 0.0
        %537 = vmatprep.subr.mxu0 0.0
        %538 = vmatpush1.msra.mxu0 0.0
        %539 = vmatprep.subr.mxu0 0.0
        %540 = vmatpush1.msra.mxu0 0.0
        %541 = vmatprep.subr.mxu0 0.0
        %542 = vmatpush1.msra.mxu0 0.0
        %543 = vmatprep.subr.mxu0 %v265
        %544 = vmatpush1.msra.mxu0 %v264
        %545 = vmatprep.subr.mxu0 %v263
        %546 = vmatpush1.msra.mxu0 %v262
        %547 = vmatprep.subr.mxu0 %v261
        %548 = vmatpush1.msra.mxu0 %v260
        %549 = vmatprep.subr.mxu0 %v259
        %550 = vmatpush1.msra.mxu0 %v258
        %551 = vmatprep.subr.mxu0 0.0
        %552 = vmatpush2.msra.mxu0 0.0
        %553 = vmatprep.subr.mxu0 0.0
        %554 = vmatpush2.msra.mxu0 0.0
        %555 = vmatprep.subr.mxu0 0.0
        %556 = vmatpush2.msra.mxu0 0.0
        %557 = vmatprep.subr.mxu0 0.0
        %558 = vmatpush2.msra.mxu0 0.0
        %559 = vmatprep.subr.mxu0 0.0
        %560 = vmatpush2.msra.mxu0 0.0
        %561 = vmatprep.subr.mxu0 0.0
        %562 = vmatpush2.msra.mxu0 0.0
        %563 = vmatprep.subr.mxu0 0.0
        %564 = vmatpush2.msra.mxu0 0.0
        %565 = vmatprep.subr.mxu0 0.0
        %566 = vmatpush2.msra.mxu0 0.0
        %567 = vmatprep.subr.mxu0 0.0
        %568 = vmatpush2.msra.mxu0 0.0
        %569 = vmatprep.subr.mxu0 0.0
        %570 = vmatpush2.msra.mxu0 0.0
        %571 = vmatprep.subr.mxu0 0.0
        %572 = vmatpush2.msra.mxu0 0.0
        %573 = vmatprep.subr.mxu0 0.0
        %574 = vmatpush2.msra.mxu0 0.0
        %575 = vmatprep.subr.mxu0 0.0
        %576 = vmatpush2.msra.mxu0 0.0
        %577 = vmatprep.subr.mxu0 0.0
        %578 = vmatpush2.msra.mxu0 0.0
        %579 = vmatprep.subr.mxu0 0.0
        %580 = vmatpush2.msra.mxu0 0.0
        %581 = vmatprep.subr.mxu0 0.0
        %582 = vmatpush2.msra.mxu0 0.0
        %583 = vmatprep.mubr.f32.mxu0 0.0
        %584 = vmatmul.mubr.f32.gmra.mxu0 %v376
        %v585 = vpop.f32.mrf.mxu0
        %v586 = vadd.f32 0.0, %v585
        %v587 = vpop.f32.mrf.mxu0
        %v588 = vadd.f32 0.0, %v587
        %589 = vmatprep.mubr.f32.mxu0 0.0
        %590 = vmatmul.mubr.f32.gmra.mxu0 %v379
        %v591 = vpop.f32.mrf.mxu0
        %v592 = vadd.f32 0.0, %v591
        %v593 = vpop.f32.mrf.mxu0
        %v594 = vadd.f32 0.0, %v593
        %595 = vmatprep.mubr.f32.mxu0 0.0
        %596 = vmatmul.mubr.f32.gmra.mxu0 %v382
        %v597 = vpop.f32.mrf.mxu0
        %v598 = vadd.f32 0.0, %v597
        %v599 = vpop.f32.mrf.mxu0
        %v600 = vadd.f32 0.0, %v599
        %601 = vmatprep.mubr.f32.mxu0 0.0
        %602 = vmatmul.mubr.f32.gmra.mxu0 %v385
        %v603 = vpop.f32.mrf.mxu0
        %v604 = vadd.f32 0.0, %v603
        %v605 = vpop.f32.mrf.mxu0
        %v606 = vadd.f32 0.0, %v605
        %607 = vmatprep.mubr.f32.mxu0 0.0
        %608 = vmatmul.mubr.f32.gmra.mxu0 %v388
        %v609 = vpop.f32.mrf.mxu0
        %v610 = vadd.f32 0.0, %v609
        %v611 = vpop.f32.mrf.mxu0
        %v612 = vadd.f32 0.0, %v611
        %613 = vmatprep.mubr.f32.mxu0 0.0
        %614 = vmatmul.mubr.f32.gmra.mxu0 %v391
        %v615 = vpop.f32.mrf.mxu0
        %v616 = vadd.f32 0.0, %v615
        %v617 = vpop.f32.mrf.mxu0
        %v618 = vadd.f32 0.0, %v617
        %619 = vmatprep.mubr.f32.mxu0 0.0
        %620 = vmatmul.mubr.f32.gmra.mxu0 %v394
        %v621 = vpop.f32.mrf.mxu0
        %v622 = vadd.f32 0.0, %v621
        %v623 = vpop.f32.mrf.mxu0
        %v624 = vadd.f32 0.0, %v623
        %625 = vmatprep.mubr.f32.mxu0 0.0
        %626 = vmatmul.mubr.f32.gmra.mxu0 %v397
        %v627 = vpop.f32.mrf.mxu0
        %v628 = vadd.f32 0.0, %v627
        %v629 = vpop.f32.mrf.mxu0
        %v630 = vadd.f32 0.0, %v629
        %631 = vmatprep.mubr.f32.mxu0 0.0
        %632 = vmatmul.mubr.f32.gmra.mxu0 %v400
        %v633 = vpop.f32.mrf.mxu0
        %v634 = vadd.f32 0.0, %v633
        %v635 = vpop.f32.mrf.mxu0
        %v636 = vadd.f32 0.0, %v635
        %637 = vmatprep.mubr.f32.mxu0 0.0
        %638 = vmatmul.mubr.f32.gmra.mxu0 %v403
        %v639 = vpop.f32.mrf.mxu0
        %v640 = vadd.f32 0.0, %v639
        %v641 = vpop.f32.mrf.mxu0
        %v642 = vadd.f32 0.0, %v641
        %643 = vmatprep.mubr.f32.mxu0 0.0
        %644 = vmatmul.mubr.f32.gmra.mxu0 %v406
        %v645 = vpop.f32.mrf.mxu0
        %v646 = vadd.f32 0.0, %v645
        %v647 = vpop.f32.mrf.mxu0
        %v648 = vadd.f32 0.0, %v647
        %649 = vmatprep.mubr.f32.mxu0 0.0
        %650 = vmatmul.mubr.f32.gmra.mxu0 %v409
        %v651 = vpop.f32.mrf.mxu0
        %v652 = vadd.f32 0.0, %v651
        %v653 = vpop.f32.mrf.mxu0
        %v654 = vadd.f32 0.0, %v653
        %655 = vmatprep.mubr.f32.mxu0 0.0
        %656 = vmatmul.mubr.f32.gmra.mxu0 %v412
        %v657 = vpop.f32.mrf.mxu0
        %v658 = vadd.f32 0.0, %v657
        %v659 = vpop.f32.mrf.mxu0
        %v660 = vadd.f32 0.0, %v659
        %661 = vmatprep.mubr.f32.mxu0 0.0
        %662 = vmatmul.mubr.f32.gmra.mxu0 %v415
        %v663 = vpop.f32.mrf.mxu0
        %v664 = vadd.f32 0.0, %v663
        %v665 = vpop.f32.mrf.mxu0
        %v666 = vadd.f32 0.0, %v665
        %667 = vmatprep.mubr.f32.mxu0 0.0
        %668 = vmatmul.mubr.f32.gmra.mxu0 %v418
        %v669 = vpop.f32.mrf.mxu0
        %v670 = vadd.f32 0.0, %v669
        %v671 = vpop.f32.mrf.mxu0
        %v672 = vadd.f32 0.0, %v671
        %673 = vmatprep.mubr.f32.mxu0 0.0
        %674 = vmatmul.mubr.f32.gmra.mxu0 %v421
        %v675 = vpop.f32.mrf.mxu0
        %v676 = vadd.f32 0.0, %v675
        %v677 = vpop.f32.mrf.mxu0
        %v678 = vadd.f32 0.0, %v677
        %679 = vmatprep.mubr.f32.mxu0 0.0
        %680 = vmatmul.mubr.f32.gmra.mxu0 %v424
        %v681 = vpop.f32.mrf.mxu0
        %v682 = vadd.f32 0.0, %v681
        %v683 = vpop.f32.mrf.mxu0
        %v684 = vadd.f32 0.0, %v683
        %685 = vmatprep.mubr.f32.mxu0 0.0
        %686 = vmatmul.mubr.f32.gmra.mxu0 %v427
        %v687 = vpop.f32.mrf.mxu0
        %v688 = vadd.f32 0.0, %v687
        %v689 = vpop.f32.mrf.mxu0
        %v690 = vadd.f32 0.0, %v689
        %691 = vmatprep.mubr.f32.mxu0 0.0
        %692 = vmatmul.mubr.f32.gmra.mxu0 %v430
        %v693 = vpop.f32.mrf.mxu0
        %v694 = vadd.f32 0.0, %v693
        %v695 = vpop.f32.mrf.mxu0
        %v696 = vadd.f32 0.0, %v695
        %697 = vmatprep.mubr.f32.mxu0 0.0
        %698 = vmatmul.mubr.f32.gmra.mxu0 %v433
        %v699 = vpop.f32.mrf.mxu0
        %v700 = vadd.f32 0.0, %v699
        %v701 = vpop.f32.mrf.mxu0
        %v702 = vadd.f32 0.0, %v701
        %703 = vmatprep.mubr.f32.mxu0 0.0
        %704 = vmatmul.mubr.f32.gmra.mxu0 %v436
        %v705 = vpop.f32.mrf.mxu0
        %v706 = vadd.f32 0.0, %v705
        %v707 = vpop.f32.mrf.mxu0
        %v708 = vadd.f32 0.0, %v707
        %709 = vmatprep.mubr.f32.mxu0 0.0
        %710 = vmatmul.mubr.f32.gmra.mxu0 %v439
        %v711 = vpop.f32.mrf.mxu0
        %v712 = vadd.f32 0.0, %v711
        %v713 = vpop.f32.mrf.mxu0
        %v714 = vadd.f32 0.0, %v713
        %715 = vmatprep.mubr.f32.mxu0 0.0
        %716 = vmatmul.mubr.f32.gmra.mxu0 %v442
        %v717 = vpop.f32.mrf.mxu0
        %v718 = vadd.f32 0.0, %v717
        %v719 = vpop.f32.mrf.mxu0
        %v720 = vadd.f32 0.0, %v719
        %721 = vmatprep.mubr.f32.mxu0 0.0
        %722 = vmatmul.mubr.f32.gmra.mxu0 %v445
        %v723 = vpop.f32.mrf.mxu0
        %v724 = vadd.f32 0.0, %v723
        %v725 = vpop.f32.mrf.mxu0
        %v726 = vadd.f32 0.0, %v725
        %727 = vmatprep.mubr.f32.mxu0 0.0
        %728 = vmatmul.mubr.f32.gmra.mxu0 %v448
        %v729 = vpop.f32.mrf.mxu0
        %v730 = vadd.f32 0.0, %v729
        %v731 = vpop.f32.mrf.mxu0
        %v732 = vadd.f32 0.0, %v731
        %733 = vmatprep.mubr.f32.mxu0 0.0
        %734 = vmatmul.mubr.f32.gmra.mxu0 %v451
        %v735 = vpop.f32.mrf.mxu0
        %v736 = vadd.f32 0.0, %v735
        %v737 = vpop.f32.mrf.mxu0
        %v738 = vadd.f32 0.0, %v737
        %739 = vmatprep.mubr.f32.mxu0 0.0
        %740 = vmatmul.mubr.f32.gmra.mxu0 %v454
        %v741 = vpop.f32.mrf.mxu0
        %v742 = vadd.f32 0.0, %v741
        %v743 = vpop.f32.mrf.mxu0
        %v744 = vadd.f32 0.0, %v743
        %745 = vmatprep.mubr.f32.mxu0 0.0
        %746 = vmatmul.mubr.f32.gmra.mxu0 %v457
        %v747 = vpop.f32.mrf.mxu0
        %v748 = vadd.f32 0.0, %v747
        %v749 = vpop.f32.mrf.mxu0
        %v750 = vadd.f32 0.0, %v749
        %751 = vmatprep.mubr.f32.mxu0 0.0
        %752 = vmatmul.mubr.f32.gmra.mxu0 %v460
        %v753 = vpop.f32.mrf.mxu0
        %v754 = vadd.f32 0.0, %v753
        %v755 = vpop.f32.mrf.mxu0
        %v756 = vadd.f32 0.0, %v755
        %757 = vmatprep.mubr.f32.mxu0 0.0
        %758 = vmatmul.mubr.f32.gmra.mxu0 %v463
        %v759 = vpop.f32.mrf.mxu0
        %v760 = vadd.f32 0.0, %v759
        %v761 = vpop.f32.mrf.mxu0
        %v762 = vadd.f32 0.0, %v761
        %763 = vmatprep.mubr.f32.mxu0 0.0
        %764 = vmatmul.mubr.f32.gmra.mxu0 %v466
        %v765 = vpop.f32.mrf.mxu0
        %v766 = vadd.f32 0.0, %v765
        %v767 = vpop.f32.mrf.mxu0
        %v768 = vadd.f32 0.0, %v767
        %769 = vmatprep.mubr.f32.mxu0 0.0
        %770 = vmatmul.mubr.f32.gmra.mxu0 %v469
        %v771 = vpop.f32.mrf.mxu0
        %v772 = vadd.f32 0.0, %v771
        %v773 = vpop.f32.mrf.mxu0
        %v774 = vadd.f32 0.0, %v773
        %775 = vmatprep.mubr.f32.mxu0 0.0
        %776 = vmatmul.mubr.f32.gmra.mxu0 %v472
        %v777 = vpop.f32.mrf.mxu0
        %v778 = vadd.f32 0.0, %v777
        %v779 = vpop.f32.mrf.mxu0
        %v780 = vadd.f32 0.0, %v779
        %781 = vmatprep.mubr.f32.mxu0 0.0
        %782 = vmatmul.mubr.f32.gmra.mxu0 %v475
        %v783 = vpop.f32.mrf.mxu0
        %v784 = vadd.f32 0.0, %v783
        %v785 = vpop.f32.mrf.mxu0
        %v786 = vadd.f32 0.0, %v785
        %787 = vmatprep.mubr.f32.mxu0 0.0
        %788 = vmatmul.mubr.f32.gmra.mxu0 %v478
        %v789 = vpop.f32.mrf.mxu0
        %v790 = vadd.f32 0.0, %v789
        %v791 = vpop.f32.mrf.mxu0
        %v792 = vadd.f32 0.0, %v791
        %793 = vmatprep.mubr.f32.mxu0 0.0
        %794 = vmatmul.mubr.f32.gmra.mxu0 %v481
        %v795 = vpop.f32.mrf.mxu0
        %v796 = vadd.f32 0.0, %v795
        %v797 = vpop.f32.mrf.mxu0
        %v798 = vadd.f32 0.0, %v797
        %799 = vmatprep.mubr.f32.mxu0 0.0
        %800 = vmatmul.mubr.f32.gmra.mxu0 %v484
        %v801 = vpop.f32.mrf.mxu0
        %v802 = vadd.f32 0.0, %v801
        %v803 = vpop.f32.mrf.mxu0
        %v804 = vadd.f32 0.0, %v803
        %805 = vmatprep.mubr.f32.mxu0 0.0
        %806 = vmatmul.mubr.f32.gmra.mxu0 %v487
        %v807 = vpop.f32.mrf.mxu0
        %v808 = vadd.f32 0.0, %v807
        %v809 = vpop.f32.mrf.mxu0
        %v810 = vadd.f32 0.0, %v809
        %811 = vmatprep.mubr.f32.mxu0 0.0
        %812 = vmatmul.mubr.f32.gmra.mxu0 %v490
        %v813 = vpop.f32.mrf.mxu0
        %v814 = vadd.f32 0.0, %v813
        %v815 = vpop.f32.mrf.mxu0
        %v816 = vadd.f32 0.0, %v815
        %817 = vmatprep.mubr.f32.mxu0 0.0
        %818 = vmatmul.mubr.f32.gmra.mxu0 %v493
        %v819 = vpop.f32.mrf.mxu0
        %v820 = vadd.f32 0.0, %v819
        %v821 = vpop.f32.mrf.mxu0
        %v822 = vadd.f32 0.0, %v821
        %823 = vmatprep.mubr.f32.mxu0 0.0
        %824 = vmatmul.mubr.f32.gmra.mxu0 %v496
        %v825 = vpop.f32.mrf.mxu0
        %v826 = vadd.f32 0.0, %v825
        %v827 = vpop.f32.mrf.mxu0
        %v828 = vadd.f32 0.0, %v827
        %829 = vmatprep.mubr.f32.mxu0 0.0
        %830 = vmatmul.mubr.f32.gmra.mxu0 %v499
        %v831 = vpop.f32.mrf.mxu0
        %v832 = vadd.f32 0.0, %v831
        %v833 = vpop.f32.mrf.mxu0
        %v834 = vadd.f32 0.0, %v833
        %835 = vmatprep.mubr.f32.mxu0 0.0
        %836 = vmatmul.mubr.f32.gmra.mxu0 %v502
        %v837 = vpop.f32.mrf.mxu0
        %v838 = vadd.f32 0.0, %v837
        %v839 = vpop.f32.mrf.mxu0
        %v840 = vadd.f32 0.0, %v839
        %841 = vmatprep.mubr.f32.mxu0 0.0
        %842 = vmatmul.mubr.f32.gmra.mxu0 %v505
        %v843 = vpop.f32.mrf.mxu0
        %v844 = vadd.f32 0.0, %v843
        %v845 = vpop.f32.mrf.mxu0
        %v846 = vadd.f32 0.0, %v845
        %847 = vmatprep.mubr.f32.mxu0 0.0
        %848 = vmatmul.mubr.f32.gmra.mxu0 %v508
        %v849 = vpop.f32.mrf.mxu0
        %v850 = vadd.f32 0.0, %v849
        %v851 = vpop.f32.mrf.mxu0
        %v852 = vadd.f32 0.0, %v851
        %853 = vmatprep.mubr.f32.mxu0 0.0
        %854 = vmatmul.mubr.f32.gmra.mxu0 %v511
        %v855 = vpop.f32.mrf.mxu0
        %v856 = vadd.f32 0.0, %v855
        %v857 = vpop.f32.mrf.mxu0
        %v858 = vadd.f32 0.0, %v857
        %859 = vmatprep.mubr.f32.mxu0 0.0
        %860 = vmatmul.mubr.f32.gmra.mxu0 %v514
        %v861 = vpop.f32.mrf.mxu0
        %v862 = vadd.f32 0.0, %v861
        %v863 = vpop.f32.mrf.mxu0
        %v864 = vadd.f32 0.0, %v863
        %865 = vmatprep.mubr.f32.mxu0 0.0
        %866 = vmatmul.mubr.f32.gmra.mxu0 %v517
        %v867 = vpop.f32.mrf.mxu0
        %v868 = vadd.f32 0.0, %v867
        %v869 = vpop.f32.mrf.mxu0
        %v870 = vadd.f32 0.0, %v869
        %871 = vdwg.mxu0
        %v872 = vmax.f32 %v682, %v684
        %873 = vmax.xlane.f32.xlu0 %v872
        %v874 = vpop.xlane.xlu0 %873
        %v875 = vmax.f32 %v688, %v690
        %876 = vmax.xlane.f32.xlu0 %v875
        %v877 = vpop.xlane.xlu0 %876
        %v878 = vmax.f32 %v694, %v696
        %879 = vmax.xlane.f32.xlu0 %v878
        %v880 = vpop.xlane.xlu0 %879
        %v881 = vmax.f32 %v700, %v702
        %882 = vmax.xlane.f32.xlu0 %v881
        %v883 = vpop.xlane.xlu0 %882
        %v884 = vmax.f32 %v706, %v708
        %885 = vmax.xlane.f32.xlu0 %v884
        %v886 = vpop.xlane.xlu0 %885
        %v887 = vmax.f32 %v712, %v714
        %888 = vmax.xlane.f32.xlu0 %v887
        %v889 = vpop.xlane.xlu0 %888
        %v890 = vmax.f32 %v718, %v720
        %891 = vmax.xlane.f32.xlu0 %v890
        %v892 = vpop.xlane.xlu0 %891
        %v893 = vmax.f32 %v724, %v726
        %894 = vmax.xlane.f32.xlu0 %v893
        %v895 = vpop.xlane.xlu0 %894
        %v896 = vmax.f32 %v730, %v732
        %897 = vmax.xlane.f32.xlu0 %v896
        %v898 = vpop.xlane.xlu0 %897
        %v899 = vmax.f32 %v736, %v738
        %900 = vmax.xlane.f32.xlu0 %v899
        %v901 = vpop.xlane.xlu0 %900
        %v902 = vmax.f32 %v742, %v744
        %903 = vmax.xlane.f32.xlu0 %v902
        %v904 = vpop.xlane.xlu0 %903
        %v905 = vmax.f32 %v748, %v750
        %906 = vmax.xlane.f32.xlu0 %v905
        %v907 = vpop.xlane.xlu0 %906
        %v908 = vmax.f32 %v754, %v756
        %909 = vmax.xlane.f32.xlu0 %v908
        %v910 = vpop.xlane.xlu0 %909
        %v911 = vmax.f32 %v760, %v762
        %912 = vmax.xlane.f32.xlu0 %v911
        %v913 = vpop.xlane.xlu0 %912
        %v914 = vmax.f32 %v766, %v768
        %915 = vmax.xlane.f32.xlu0 %v914
        %v916 = vpop.xlane.xlu0 %915
        %v917 = vmax.f32 %v772, %v774
        %918 = vmax.xlane.f32.xlu0 %v917
        %v919 = vpop.xlane.xlu0 %918
        %v920 = vsub.f32 %v682, %v874
        %v921 = vsub.f32 %v684, %v874
        %v922 = vsub.f32 %v688, %v877
        %v923 = vsub.f32 %v690, %v877
        %v924 = vsub.f32 %v694, %v880
        %v925 = vsub.f32 %v696, %v880
        %v926 = vsub.f32 %v700, %v883
        %v927 = vsub.f32 %v702, %v883
        %v928 = vsub.f32 %v706, %v886
        %v929 = vsub.f32 %v708, %v886
        %v930 = vsub.f32 %v712, %v889
        %v931 = vsub.f32 %v714, %v889
        %v932 = vsub.f32 %v718, %v892
        %v933 = vsub.f32 %v720, %v892
        %v934 = vsub.f32 %v724, %v895
        %v935 = vsub.f32 %v726, %v895
        %v936 = vsub.f32 %v730, %v898
        %v937 = vsub.f32 %v732, %v898
        %v938 = vsub.f32 %v736, %v901
        %v939 = vsub.f32 %v738, %v901
        %v940 = vsub.f32 %v742, %v904
        %v941 = vsub.f32 %v744, %v904
        %v942 = vsub.f32 %v748, %v907
        %v943 = vsub.f32 %v750, %v907
        %v944 = vsub.f32 %v754, %v910
        %v945 = vsub.f32 %v756, %v910
        %v946 = vsub.f32 %v760, %v913
        %v947 = vsub.f32 %v762, %v913
        %v948 = vsub.f32 %v766, %v916
        %v949 = vsub.f32 %v768, %v916
        %v950 = vsub.f32 %v772, %v919
        %v951 = vsub.f32 %v774, %v919
        %v952 = vmul.f32 %v920, 1.442695
        %v953 = vpow.pop %v952
        %v954 = vmul.f32 %v921, 1.442695
        %v955 = vpow.pop %v954
        %v956 = vmul.f32 %v922, 1.442695
        %v957 = vpow.pop %v956
        %v958 = vmul.f32 %v923, 1.442695
        %v959 = vpow.pop %v958
        %v960 = vmul.f32 %v924, 1.442695
        %v961 = vpow.pop %v960
        %v962 = vmul.f32 %v925, 1.442695
        %v963 = vpow.pop %v962
        %v964 = vmul.f32 %v926, 1.442695
        %v965 = vpow.pop %v964
        %v966 = vmul.f32 %v927, 1.442695
        %v967 = vpow.pop %v966
        %v968 = vmul.f32 %v928, 1.442695
        %v969 = vpow.pop %v968
        %v970 = vmul.f32 %v929, 1.442695
        %v971 = vpow.pop %v970
        %v972 = vmul.f32 %v930, 1.442695
        %v973 = vpow.pop %v972
        %v974 = vmul.f32 %v931, 1.442695
        %v975 = vpow.pop %v974
        %v976 = vmul.f32 %v932, 1.442695
        %v977 = vpow.pop %v976
        %v978 = vmul.f32 %v933, 1.442695
        %v979 = vpow.pop %v978
        %v980 = vmul.f32 %v934, 1.442695
        %v981 = vpow.pop %v980
        %v982 = vmul.f32 %v935, 1.442695
        %v983 = vpow.pop %v982
        %v984 = vmul.f32 %v936, 1.442695
        %v985 = vpow.pop %v984
        %v986 = vmul.f32 %v937, 1.442695
        %v987 = vpow.pop %v986
        %v988 = vmul.f32 %v938, 1.442695
        %v989 = vpow.pop %v988
        %v990 = vmul.f32 %v939, 1.442695
        %v991 = vpow.pop %v990
        %v992 = vmul.f32 %v940, 1.442695
        %v993 = vpow.pop %v992
        %v994 = vmul.f32 %v941, 1.442695
        %v995 = vpow.pop %v994
        %v996 = vmul.f32 %v942, 1.442695
        %v997 = vpow.pop %v996
        %v998 = vmul.f32 %v943, 1.442695
        %v999 = vpow.pop %v998
        %v1000 = vmul.f32 %v944, 1.442695
        %v1001 = vpow.pop %v1000
        %v1002 = vmul.f32 %v945, 1.442695
        %v1003 = vpow.pop %v1002
        %v1004 = vmul.f32 %v946, 1.442695
        %v1005 = vpow.pop %v1004
        %v1006 = vmul.f32 %v947, 1.442695
        %v1007 = vpow.pop %v1006
        %v1008 = vmul.f32 %v948, 1.442695
        %v1009 = vpow.pop %v1008
        %v1010 = vmul.f32 %v949, 1.442695
        %v1011 = vpow.pop %v1010
        %v1012 = vmul.f32 %v950, 1.442695
        %v1013 = vpow.pop %v1012
        %v1014 = vmul.f32 %v951, 1.442695
        %v1015 = vpow.pop %v1014
        %v1016 = vadd.f32 %v953, %v955
        %1017 = vadd.xlane.f32.xlu0 %v1016
        %v1018 = vpop.xlane.xlu0 %1017
        %v1019 = vadd.f32 %v957, %v959
        %1020 = vadd.xlane.f32.xlu0 %v1019
        %v1021 = vpop.xlane.xlu0 %1020
        %v1022 = vadd.f32 %v961, %v963
        %1023 = vadd.xlane.f32.xlu0 %v1022
        %v1024 = vpop.xlane.xlu0 %1023
        %v1025 = vadd.f32 %v965, %v967
        %1026 = vadd.xlane.f32.xlu0 %v1025
        %v1027 = vpop.xlane.xlu0 %1026
        %v1028 = vadd.f32 %v969, %v971
        %1029 = vadd.xlane.f32.xlu0 %v1028
        %v1030 = vpop.xlane.xlu0 %1029
        %v1031 = vadd.f32 %v973, %v975
        %1032 = vadd.xlane.f32.xlu0 %v1031
        %v1033 = vpop.xlane.xlu0 %1032
        %v1034 = vadd.f32 %v977, %v979
        %1035 = vadd.xlane.f32.xlu0 %v1034
        %v1036 = vpop.xlane.xlu0 %1035
        %v1037 = vadd.f32 %v981, %v983
        %1038 = vadd.xlane.f32.xlu0 %v1037
        %v1039 = vpop.xlane.xlu0 %1038
        %v1040 = vadd.f32 %v985, %v987
        %1041 = vadd.xlane.f32.xlu0 %v1040
        %v1042 = vpop.xlane.xlu0 %1041
        %v1043 = vadd.f32 %v989, %v991
        %1044 = vadd.xlane.f32.xlu0 %v1043
        %v1045 = vpop.xlane.xlu0 %1044
        %v1046 = vadd.f32 %v993, %v995
        %1047 = vadd.xlane.f32.xlu0 %v1046
        %v1048 = vpop.xlane.xlu0 %1047
        %v1049 = vadd.f32 %v997, %v999
        %1050 = vadd.xlane.f32.xlu0 %v1049
        %v1051 = vpop.xlane.xlu0 %1050
        %v1052 = vadd.f32 %v1001, %v1003
        %1053 = vadd.xlane.f32.xlu0 %v1052
        %v1054 = vpop.xlane.xlu0 %1053
        %v1055 = vadd.f32 %v1005, %v1007
        %1056 = vadd.xlane.f32.xlu0 %v1055
        %v1057 = vpop.xlane.xlu0 %1056
        %v1058 = vadd.f32 %v1009, %v1011
        %1059 = vadd.xlane.f32.xlu0 %v1058
        %v1060 = vpop.xlane.xlu0 %1059
        %v1061 = vadd.f32 %v1013, %v1015
        %1062 = vadd.xlane.f32.xlu0 %v1061
        %v1063 = vpop.xlane.xlu0 %1062
        %v1064 = vrcp.pop %v1018
        %v1065 = vrcp.pop %v1021
        %v1066 = vrcp.pop %v1024
        %v1067 = vrcp.pop %v1027
        %v1068 = vrcp.pop %v1030
        %v1069 = vrcp.pop %v1033
        %v1070 = vrcp.pop %v1036
        %v1071 = vrcp.pop %v1039
        %v1072 = vrcp.pop %v1042
        %v1073 = vrcp.pop %v1045
        %v1074 = vrcp.pop %v1048
        %v1075 = vrcp.pop %v1051
        %v1076 = vrcp.pop %v1054
        %v1077 = vrcp.pop %v1057
        %v1078 = vrcp.pop %v1060
        %v1079 = vrcp.pop %v1063
        %v1080 = vmul.f32 %v953, %v1064
        %v1081 = vmul.f32 %v955, %v1064
        %v1082 = vmul.f32 %v957, %v1065
        %v1083 = vmul.f32 %v959, %v1065
        %v1084 = vmul.f32 %v961, %v1066
        %v1085 = vmul.f32 %v963, %v1066
        %v1086 = vmul.f32 %v965, %v1067
        %v1087 = vmul.f32 %v967, %v1067
        %v1088 = vmul.f32 %v969, %v1068
        %v1089 = vmul.f32 %v971, %v1068
        %v1090 = vmul.f32 %v973, %v1069
        %v1091 = vmul.f32 %v975, %v1069
        %v1092 = vmul.f32 %v977, %v1070
        %v1093 = vmul.f32 %v979, %v1070
        %v1094 = vmul.f32 %v981, %v1071
        %v1095 = vmul.f32 %v983, %v1071
        %v1096 = vmul.f32 %v985, %v1072
        %v1097 = vmul.f32 %v987, %v1072
        %v1098 = vmul.f32 %v989, %v1073
        %v1099 = vmul.f32 %v991, %v1073
        %v1100 = vmul.f32 %v993, %v1074
        %v1101 = vmul.f32 %v995, %v1074
        %v1102 = vmul.f32 %v997, %v1075
        %v1103 = vmul.f32 %v999, %v1075
        %v1104 = vmul.f32 %v1001, %v1076
        %v1105 = vmul.f32 %v1003, %v1076
        %v1106 = vmul.f32 %v1005, %v1077
        %v1107 = vmul.f32 %v1007, %v1077
        %v1108 = vmul.f32 %v1009, %v1078
        %v1109 = vmul.f32 %v1011, %v1078
        %v1110 = vmul.f32 %v1013, %v1079
        %v1111 = vmul.f32 %v1015, %v1079
        %1112 = vmatprep.subr.mxu0 0.0
        %1113 = vmatpush1.xpose.msra.mxu0 0.0
        %1114 = vmatprep.subr.mxu0 0.0
        %1115 = vmatpush1.xpose.msra.mxu0 0.0
        %1116 = vmatprep.subr.mxu0 0.0
        %1117 = vmatpush1.xpose.msra.mxu0 0.0
        %1118 = vmatprep.subr.mxu0 0.0
        %1119 = vmatpush1.xpose.msra.mxu0 0.0
        %1120 = vmatprep.subr.mxu0 0.0
        %1121 = vmatpush1.xpose.msra.mxu0 0.0
        %1122 = vmatprep.subr.mxu0 0.0
        %1123 = vmatpush1.xpose.msra.mxu0 0.0
        %1124 = vmatprep.subr.mxu0 0.0
        %1125 = vmatpush1.xpose.msra.mxu0 0.0
        %1126 = vmatprep.subr.mxu0 0.0
        %1127 = vmatpush1.xpose.msra.mxu0 0.0
        %1128 = vmatprep.subr.mxu0 0.0
        %1129 = vmatpush1.xpose.msra.mxu0 0.0
        %1130 = vmatprep.subr.mxu0 0.0
        %1131 = vmatpush1.xpose.msra.mxu0 0.0
        %1132 = vmatprep.subr.mxu0 0.0
        %1133 = vmatpush1.xpose.msra.mxu0 0.0
        %1134 = vmatprep.subr.mxu0 0.0
        %1135 = vmatpush1.xpose.msra.mxu0 0.0
        %1136 = vmatprep.subr.mxu0 %v798
        %1137 = vmatpush1.xpose.msra.mxu0 %v796
        %1138 = vmatprep.subr.mxu0 %v792
        %1139 = vmatpush1.xpose.msra.mxu0 %v790
        %1140 = vmatprep.subr.mxu0 %v786
        %1141 = vmatpush1.xpose.msra.mxu0 %v784
        %1142 = vmatprep.subr.mxu0 %v780
        %1143 = vmatpush1.xpose.msra.mxu0 %v778
        %1144 = vmatprep.subr.mxu0 0.0
        %1145 = vmatpush2.xpose.msra.mxu0 0.0
        %1146 = vmatprep.subr.mxu0 0.0
        %1147 = vmatpush2.xpose.msra.mxu0 0.0
        %1148 = vmatprep.subr.mxu0 0.0
        %1149 = vmatpush2.xpose.msra.mxu0 0.0
        %1150 = vmatprep.subr.mxu0 0.0
        %1151 = vmatpush2.xpose.msra.mxu0 0.0
        %1152 = vmatprep.subr.mxu0 0.0
        %1153 = vmatpush2.xpose.msra.mxu0 0.0
        %1154 = vmatprep.subr.mxu0 0.0
        %1155 = vmatpush2.xpose.msra.mxu0 0.0
        %1156 = vmatprep.subr.mxu0 0.0
        %1157 = vmatpush2.xpose.msra.mxu0 0.0
        %1158 = vmatprep.subr.mxu0 0.0
        %1159 = vmatpush2.xpose.msra.mxu0 0.0
        %1160 = vmatprep.subr.mxu0 0.0
        %1161 = vmatpush2.xpose.msra.mxu0 0.0
        %1162 = vmatprep.subr.mxu0 0.0
        %1163 = vmatpush2.xpose.msra.mxu0 0.0
        %1164 = vmatprep.subr.mxu0 0.0
        %1165 = vmatpush2.xpose.msra.mxu0 0.0
        %1166 = vmatprep.subr.mxu0 0.0
        %1167 = vmatpush2.xpose.msra.mxu0 0.0
        %1168 = vmatprep.subr.mxu0 0.0
        %1169 = vmatpush2.xpose.msra.mxu0 0.0
        %1170 = vmatprep.subr.mxu0 0.0
        %1171 = vmatpush2.xpose.msra.mxu0 0.0
        %1172 = vmatprep.subr.mxu0 0.0
        %1173 = vmatpush2.xpose.msra.mxu0 0.0
        %1174 = vmatprep.subr.mxu0 0.0
        %1175 = vmatpush2.xpose.msra.mxu0 0.0
        %1176 = vmatprep.mubr.f32.mxu0 %v1081
        %1177 = vmatmul.mubr.f32.gmra.mxu0 %v1080
        %v1178 = vpop.f32.mrf.mxu0
        %v1179 = vadd.f32 0.0, %v1178
        %v1180 = vpop.f32.mrf.mxu0
        %1181 = vmatprep.mubr.f32.mxu0 %v1083
        %1182 = vmatmul.mubr.f32.gmra.mxu0 %v1082
        %v1183 = vpop.f32.mrf.mxu0
        %v1184 = vadd.f32 0.0, %v1183
        %v1185 = vpop.f32.mrf.mxu0
        %1186 = vmatprep.mubr.f32.mxu0 %v1085
        %1187 = vmatmul.mubr.f32.gmra.mxu0 %v1084
        %v1188 = vpop.f32.mrf.mxu0
        %v1189 = vadd.f32 0.0, %v1188
        %v1190 = vpop.f32.mrf.mxu0
        %1191 = vmatprep.mubr.f32.mxu0 %v1087
        %1192 = vmatmul.mubr.f32.gmra.mxu0 %v1086
        %v1193 = vpop.f32.mrf.mxu0
        %v1194 = vadd.f32 0.0, %v1193
        %v1195 = vpop.f32.mrf.mxu0
        %1196 = vdwg.mxu0
        %1197 = vmatprep.subr.mxu0 0.0
        %1198 = vmatpush1.xpose.msra.mxu0 0.0
        %1199 = vmatprep.subr.mxu0 0.0
        %1200 = vmatpush1.xpose.msra.mxu0 0.0
        %1201 = vmatprep.subr.mxu0 0.0
        %1202 = vmatpush1.xpose.msra.mxu0 0.0
        %1203 = vmatprep.subr.mxu0 0.0
        %1204 = vmatpush1.xpose.msra.mxu0 0.0
        %1205 = vmatprep.subr.mxu0 0.0
        %1206 = vmatpush1.xpose.msra.mxu0 0.0
        %1207 = vmatprep.subr.mxu0 0.0
        %1208 = vmatpush1.xpose.msra.mxu0 0.0
        %1209 = vmatprep.subr.mxu0 0.0
        %1210 = vmatpush1.xpose.msra.mxu0 0.0
        %1211 = vmatprep.subr.mxu0 0.0
        %1212 = vmatpush1.xpose.msra.mxu0 0.0
        %1213 = vmatprep.subr.mxu0 0.0
        %1214 = vmatpush1.xpose.msra.mxu0 0.0
        %1215 = vmatprep.subr.mxu0 0.0
        %1216 = vmatpush1.xpose.msra.mxu0 0.0
        %1217 = vmatprep.subr.mxu0 0.0
        %1218 = vmatpush1.xpose.msra.mxu0 0.0
        %1219 = vmatprep.subr.mxu0 0.0
        %1220 = vmatpush1.xpose.msra.mxu0 0.0
        %1221 = vmatprep.subr.mxu0 %v822
        %1222 = vmatpush1.xpose.msra.mxu0 %v820
        %1223 = vmatprep.subr.mxu0 %v816
        %1224 = vmatpush1.xpose.msra.mxu0 %v814
        %1225 = vmatprep.subr.mxu0 %v810
        %1226 = vmatpush1.xpose.msra.mxu0 %v808
        %1227 = vmatprep.subr.mxu0 %v804
        %1228 = vmatpush1.xpose.msra.mxu0 %v802
        %1229 = vmatprep.subr.mxu0 0.0
        %1230 = vmatpush2.xpose.msra.mxu0 0.0
        %1231 = vmatprep.subr.mxu0 0.0
        %1232 = vmatpush2.xpose.msra.mxu0 0.0
        %1233 = vmatprep.subr.mxu0 0.0
        %1234 = vmatpush2.xpose.msra.mxu0 0.0
        %1235 = vmatprep.subr.mxu0 0.0
        %1236 = vmatpush2.xpose.msra.mxu0 0.0
        %1237 = vmatprep.subr.mxu0 0.0
        %1238 = vmatpush2.xpose.msra.mxu0 0.0
        %1239 = vmatprep.subr.mxu0 0.0
        %1240 = vmatpush2.xpose.msra.mxu0 0.0
        %1241 = vmatprep.subr.mxu0 0.0
        %1242 = vmatpush2.xpose.msra.mxu0 0.0
        %1243 = vmatprep.subr.mxu0 0.0
        %1244 = vmatpush2.xpose.msra.mxu0 0.0
        %1245 = vmatprep.subr.mxu0 0.0
        %1246 = vmatpush2.xpose.msra.mxu0 0.0
        %1247 = vmatprep.subr.mxu0 0.0
        %1248 = vmatpush2.xpose.msra.mxu0 0.0
        %1249 = vmatprep.subr.mxu0 0.0
        %1250 = vmatpush2.xpose.msra.mxu0 0.0
        %1251 = vmatprep.subr.mxu0 0.0
        %1252 = vmatpush2.xpose.msra.mxu0 0.0
        %1253 = vmatprep.subr.mxu0 0.0
        %1254 = vmatpush2.xpose.msra.mxu0 0.0
        %1255 = vmatprep.subr.mxu0 0.0
        %1256 = vmatpush2.xpose.msra.mxu0 0.0
        %1257 = vmatprep.subr.mxu0 0.0
        %1258 = vmatpush2.xpose.msra.mxu0 0.0
        %1259 = vmatprep.subr.mxu0 0.0
        %1260 = vmatpush2.xpose.msra.mxu0 0.0
        %1261 = vmatprep.mubr.f32.mxu0 %v1089
        %1262 = vmatmul.mubr.f32.gmra.mxu0 %v1088
        %v1263 = vpop.f32.mrf.mxu0
        %v1264 = vadd.f32 0.0, %v1263
        %v1265 = vpop.f32.mrf.mxu0
        %1266 = vmatprep.mubr.f32.mxu0 %v1091
        %1267 = vmatmul.mubr.f32.gmra.mxu0 %v1090
        %v1268 = vpop.f32.mrf.mxu0
        %v1269 = vadd.f32 0.0, %v1268
        %v1270 = vpop.f32.mrf.mxu0
        %1271 = vmatprep.mubr.f32.mxu0 %v1093
        %1272 = vmatmul.mubr.f32.gmra.mxu0 %v1092
        %v1273 = vpop.f32.mrf.mxu0
        %v1274 = vadd.f32 0.0, %v1273
        %v1275 = vpop.f32.mrf.mxu0
        %1276 = vmatprep.mubr.f32.mxu0 %v1095
        %1277 = vmatmul.mubr.f32.gmra.mxu0 %v1094
        %v1278 = vpop.f32.mrf.mxu0
        %v1279 = vadd.f32 0.0, %v1278
        %v1280 = vpop.f32.mrf.mxu0
        %1281 = vdwg.mxu0
        %1282 = vmatprep.subr.mxu0 0.0
        %1283 = vmatpush1.xpose.msra.mxu0 0.0
        %1284 = vmatprep.subr.mxu0 0.0
        %1285 = vmatpush1.xpose.msra.mxu0 0.0
        %1286 = vmatprep.subr.mxu0 0.0
        %1287 = vmatpush1.xpose.msra.mxu0 0.0
        %1288 = vmatprep.subr.mxu0 0.0
        %1289 = vmatpush1.xpose.msra.mxu0 0.0
        %1290 = vmatprep.subr.mxu0 0.0
        %1291 = vmatpush1.xpose.msra.mxu0 0.0
        %1292 = vmatprep.subr.mxu0 0.0
        %1293 = vmatpush1.xpose.msra.mxu0 0.0
        %1294 = vmatprep.subr.mxu0 0.0
        %1295 = vmatpush1.xpose.msra.mxu0 0.0
        %1296 = vmatprep.subr.mxu0 0.0
        %1297 = vmatpush1.xpose.msra.mxu0 0.0
        %1298 = vmatprep.subr.mxu0 0.0
        %1299 = vmatpush1.xpose.msra.mxu0 0.0
        %1300 = vmatprep.subr.mxu0 0.0
        %1301 = vmatpush1.xpose.msra.mxu0 0.0
        %1302 = vmatprep.subr.mxu0 0.0
        %1303 = vmatpush1.xpose.msra.mxu0 0.0
        %1304 = vmatprep.subr.mxu0 0.0
        %1305 = vmatpush1.xpose.msra.mxu0 0.0
        %1306 = vmatprep.subr.mxu0 %v846
        %1307 = vmatpush1.xpose.msra.mxu0 %v844
        %1308 = vmatprep.subr.mxu0 %v840
        %1309 = vmatpush1.xpose.msra.mxu0 %v838
        %1310 = vmatprep.subr.mxu0 %v834
        %1311 = vmatpush1.xpose.msra.mxu0 %v832
        %1312 = vmatprep.subr.mxu0 %v828
        %1313 = vmatpush1.xpose.msra.mxu0 %v826
        %1314 = vmatprep.subr.mxu0 0.0
        %1315 = vmatpush2.xpose.msra.mxu0 0.0
        %1316 = vmatprep.subr.mxu0 0.0
        %1317 = vmatpush2.xpose.msra.mxu0 0.0
        %1318 = vmatprep.subr.mxu0 0.0
        %1319 = vmatpush2.xpose.msra.mxu0 0.0
        %1320 = vmatprep.subr.mxu0 0.0
        %1321 = vmatpush2.xpose.msra.mxu0 0.0
        %1322 = vmatprep.subr.mxu0 0.0
        %1323 = vmatpush2.xpose.msra.mxu0 0.0
        %1324 = vmatprep.subr.mxu0 0.0
        %1325 = vmatpush2.xpose.msra.mxu0 0.0
        %1326 = vmatprep.subr.mxu0 0.0
        %1327 = vmatpush2.xpose.msra.mxu0 0.0
        %1328 = vmatprep.subr.mxu0 0.0
        %1329 = vmatpush2.xpose.msra.mxu0 0.0
        %1330 = vmatprep.subr.mxu0 0.0
        %1331 = vmatpush2.xpose.msra.mxu0 0.0
        %1332 = vmatprep.subr.mxu0 0.0
        %1333 = vmatpush2.xpose.msra.mxu0 0.0
        %1334 = vmatprep.subr.mxu0 0.0
        %1335 = vmatpush2.xpose.msra.mxu0 0.0
        %1336 = vmatprep.subr.mxu0 0.0
        %1337 = vmatpush2.xpose.msra.mxu0 0.0
        %1338 = vmatprep.subr.mxu0 0.0
        %1339 = vmatpush2.xpose.msra.mxu0 0.0
        %1340 = vmatprep.subr.mxu0 0.0
        %1341 = vmatpush2.xpose.msra.mxu0 0.0
        %1342 = vmatprep.subr.mxu0 0.0
        %1343 = vmatpush2.xpose.msra.mxu0 0.0
        %1344 = vmatprep.subr.mxu0 0.0
        %1345 = vmatpush2.xpose.msra.mxu0 0.0
        %1346 = vmatprep.mubr.f32.mxu0 %v1097
        %1347 = vmatmul.mubr.f32.gmra.mxu0 %v1096
        %v1348 = vpop.f32.mrf.mxu0
        %v1349 = vadd.f32 0.0, %v1348
        %v1350 = vpop.f32.mrf.mxu0
        %1351 = vmatprep.mubr.f32.mxu0 %v1099
        %1352 = vmatmul.mubr.f32.gmra.mxu0 %v1098
        %v1353 = vpop.f32.mrf.mxu0
        %v1354 = vadd.f32 0.0, %v1353
        %v1355 = vpop.f32.mrf.mxu0
        %1356 = vmatprep.mubr.f32.mxu0 %v1101
        %1357 = vmatmul.mubr.f32.gmra.mxu0 %v1100
        %v1358 = vpop.f32.mrf.mxu0
        %v1359 = vadd.f32 0.0, %v1358
        %v1360 = vpop.f32.mrf.mxu0
        %1361 = vmatprep.mubr.f32.mxu0 %v1103
        %1362 = vmatmul.mubr.f32.gmra.mxu0 %v1102
        %v1363 = vpop.f32.mrf.mxu0
        %v1364 = vadd.f32 0.0, %v1363
        %v1365 = vpop.f32.mrf.mxu0
        %1366 = vdwg.mxu0
        %1367 = vmatprep.subr.mxu0 0.0
        %1368 = vmatpush1.xpose.msra.mxu0 0.0
        %1369 = vmatprep.subr.mxu0 0.0
        %1370 = vmatpush1.xpose.msra.mxu0 0.0
        %1371 = vmatprep.subr.mxu0 0.0
        %1372 = vmatpush1.xpose.msra.mxu0 0.0
        %1373 = vmatprep.subr.mxu0 0.0
        %1374 = vmatpush1.xpose.msra.mxu0 0.0
        %1375 = vmatprep.subr.mxu0 0.0
        %1376 = vmatpush1.xpose.msra.mxu0 0.0
        %1377 = vmatprep.subr.mxu0 0.0
        %1378 = vmatpush1.xpose.msra.mxu0 0.0
        %1379 = vmatprep.subr.mxu0 0.0
        %1380 = vmatpush1.xpose.msra.mxu0 0.0
        %1381 = vmatprep.subr.mxu0 0.0
        %1382 = vmatpush1.xpose.msra.mxu0 0.0
        %1383 = vmatprep.subr.mxu0 0.0
        %1384 = vmatpush1.xpose.msra.mxu0 0.0
        %1385 = vmatprep.subr.mxu0 0.0
        %1386 = vmatpush1.xpose.msra.mxu0 0.0
        %1387 = vmatprep.subr.mxu0 0.0
        %1388 = vmatpush1.xpose.msra.mxu0 0.0
        %1389 = vmatprep.subr.mxu0 0.0
        %1390 = vmatpush1.xpose.msra.mxu0 0.0
        %1391 = vmatprep.subr.mxu0 %v870
        %1392 = vmatpush1.xpose.msra.mxu0 %v868
        %1393 = vmatprep.subr.mxu0 %v864
        %1394 = vmatpush1.xpose.msra.mxu0 %v862
        %1395 = vmatprep.subr.mxu0 %v858
        %1396 = vmatpush1.xpose.msra.mxu0 %v856
        %1397 = vmatprep.subr.mxu0 %v852
        %1398 = vmatpush1.xpose.msra.mxu0 %v850
        %1399 = vmatprep.subr.mxu0 0.0
        %1400 = vmatpush2.xpose.msra.mxu0 0.0
        %1401 = vmatprep.subr.mxu0 0.0
        %1402 = vmatpush2.xpose.msra.mxu0 0.0
        %1403 = vmatprep.subr.mxu0 0.0
        %1404 = vmatpush2.xpose.msra.mxu0 0.0
        %1405 = vmatprep.subr.mxu0 0.0
        %1406 = vmatpush2.xpose.msra.mxu0 0.0
        %1407 = vmatprep.subr.mxu0 0.0
        %1408 = vmatpush2.xpose.msra.mxu0 0.0
        %1409 = vmatprep.subr.mxu0 0.0
        %1410 = vmatpush2.xpose.msra.mxu0 0.0
        %1411 = vmatprep.subr.mxu0 0.0
        %1412 = vmatpush2.xpose.msra.mxu0 0.0
        %1413 = vmatprep.subr.mxu0 0.0
        %1414 = vmatpush2.xpose.msra.mxu0 0.0
        %1415 = vmatprep.subr.mxu0 0.0
        %1416 = vmatpush2.xpose.msra.mxu0 0.0
        %1417 = vmatprep.subr.mxu0 0.0
        %1418 = vmatpush2.xpose.msra.mxu0 0.0
        %1419 = vmatprep.subr.mxu0 0.0
        %1420 = vmatpush2.xpose.msra.mxu0 0.0
        %1421 = vmatprep.subr.mxu0 0.0
        %1422 = vmatpush2.xpose.msra.mxu0 0.0
        %1423 = vmatprep.subr.mxu0 0.0
        %1424 = vmatpush2.xpose.msra.mxu0 0.0
        %1425 = vmatprep.subr.mxu0 0.0
        %1426 = vmatpush2.xpose.msra.mxu0 0.0
        %1427 = vmatprep.subr.mxu0 0.0
        %1428 = vmatpush2.xpose.msra.mxu0 0.0
        %1429 = vmatprep.subr.mxu0 0.0
        %1430 = vmatpush2.xpose.msra.mxu0 0.0
        %1431 = vmatprep.mubr.f32.mxu0 %v1105
        %1432 = vmatmul.mubr.f32.gmra.mxu0 %v1104
        %v1433 = vpop.f32.mrf.mxu0
        %v1434 = vadd.f32 0.0, %v1433
        %v1435 = vpop.f32.mrf.mxu0
        %1436 = vmatprep.mubr.f32.mxu0 %v1107
        %1437 = vmatmul.mubr.f32.gmra.mxu0 %v1106
        %v1438 = vpop.f32.mrf.mxu0
        %v1439 = vadd.f32 0.0, %v1438
        %v1440 = vpop.f32.mrf.mxu0
        %1441 = vmatprep.mubr.f32.mxu0 %v1109
        %1442 = vmatmul.mubr.f32.gmra.mxu0 %v1108
        %v1443 = vpop.f32.mrf.mxu0
        %v1444 = vadd.f32 0.0, %v1443
        %v1445 = vpop.f32.mrf.mxu0
        %1446 = vmatprep.mubr.f32.mxu0 %v1111
        %1447 = vmatmul.mubr.f32.gmra.mxu0 %v1110
        %v1448 = vpop.f32.mrf.mxu0
        %v1449 = vadd.f32 0.0, %v1448
        %v1450 = vpop.f32.mrf.mxu0
        %1451 = vdwg.mxu0
        %v1452 = vmax.f32 %v586, %v592
        %v1453 = vmax.f32 %v1452, %v598
        %v1454 = vmax.f32 %v1453, %v604
        %v1455 = vrot.slane %v1454, 4
        %v1456 = vmax.f32 %v1454, %v1455
        %v1457 = vrot.slane %v1456, 2
        %v1458 = vmax.f32 %v1456, %v1457
        %v1459 = vrot.slane %v1458, 1
        %v1460 = vmax.f32 %v1458, %v1459
        %v1461 = vmax.f32 %v588, %v594
        %v1462 = vmax.f32 %v1461, %v600
        %v1463 = vmax.f32 %v1462, %v606
        %v1464 = vrot.slane %v1463, 4
        %v1465 = vmax.f32 %v1463, %v1464
        %v1466 = vrot.slane %v1465, 2
        %v1467 = vmax.f32 %v1465, %v1466
        %v1468 = vrot.slane %v1467, 1
        %v1469 = vmax.f32 %v1467, %v1468
        %v1470 = vmax.f32 %v610, %v616
        %v1471 = vmax.f32 %v1470, %v622
        %v1472 = vmax.f32 %v1471, %v628
        %v1473 = vrot.slane %v1472, 4
        %v1474 = vmax.f32 %v1472, %v1473
        %v1475 = vrot.slane %v1474, 2
        %v1476 = vmax.f32 %v1474, %v1475
        %v1477 = vrot.slane %v1476, 1
        %v1478 = vmax.f32 %v1476, %v1477
        %v1479 = vmax.f32 %v612, %v618
        %v1480 = vmax.f32 %v1479, %v624
        %v1481 = vmax.f32 %v1480, %v630
        %v1482 = vrot.slane %v1481, 4
        %v1483 = vmax.f32 %v1481, %v1482
        %v1484 = vrot.slane %v1483, 2
        %v1485 = vmax.f32 %v1483, %v1484
        %v1486 = vrot.slane %v1485, 1
        %v1487 = vmax.f32 %v1485, %v1486
        %v1488 = vmax.f32 %v634, %v640
        %v1489 = vmax.f32 %v1488, %v646
        %v1490 = vmax.f32 %v1489, %v652
        %v1491 = vrot.slane %v1490, 4
        %v1492 = vmax.f32 %v1490, %v1491
        %v1493 = vrot.slane %v1492, 2
        %v1494 = vmax.f32 %v1492, %v1493
        %v1495 = vrot.slane %v1494, 1
        %v1496 = vmax.f32 %v1494, %v1495
        %v1497 = vmax.f32 %v636, %v642
        %v1498 = vmax.f32 %v1497, %v648
        %v1499 = vmax.f32 %v1498, %v654
        %v1500 = vrot.slane %v1499, 4
        %v1501 = vmax.f32 %v1499, %v1500
        %v1502 = vrot.slane %v1501, 2
        %v1503 = vmax.f32 %v1501, %v1502
        %v1504 = vrot.slane %v1503, 1
        %v1505 = vmax.f32 %v1503, %v1504
        %v1506 = vmax.f32 %v658, %v664
        %v1507 = vmax.f32 %v1506, %v670
        %v1508 = vmax.f32 %v1507, %v676
        %v1509 = vrot.slane %v1508, 4
        %v1510 = vmax.f32 %v1508, %v1509
        %v1511 = vrot.slane %v1510, 2
        %v1512 = vmax.f32 %v1510, %v1511
        %v1513 = vrot.slane %v1512, 1
        %v1514 = vmax.f32 %v1512, %v1513
        %v1515 = vmax.f32 %v660, %v666
        %v1516 = vmax.f32 %v1515, %v672
        %v1517 = vmax.f32 %v1516, %v678
        %v1518 = vrot.slane %v1517, 4
        %v1519 = vmax.f32 %v1517, %v1518
        %v1520 = vrot.slane %v1519, 2
        %v1521 = vmax.f32 %v1519, %v1520
        %v1522 = vrot.slane %v1521, 1
        %v1523 = vmax.f32 %v1521, %v1522
        %v1524 = vsub.f32 %v586, %v1460
        %v1525 = vsub.f32 %v588, %v1469
        %v1526 = vsub.f32 %v592, %v1460
        %v1527 = vsub.f32 %v594, %v1469
        %v1528 = vsub.f32 %v598, %v1460
        %v1529 = vsub.f32 %v600, %v1469
        %v1530 = vsub.f32 %v604, %v1460
        %v1531 = vsub.f32 %v606, %v1469
        %v1532 = vsub.f32 %v610, %v1478
        %v1533 = vsub.f32 %v612, %v1487
        %v1534 = vsub.f32 %v616, %v1478
        %v1535 = vsub.f32 %v618, %v1487
        %v1536 = vsub.f32 %v622, %v1478
        %v1537 = vsub.f32 %v624, %v1487
        %v1538 = vsub.f32 %v628, %v1478
        %v1539 = vsub.f32 %v630, %v1487
        %v1540 = vsub.f32 %v634, %v1496
        %v1541 = vsub.f32 %v636, %v1505
        %v1542 = vsub.f32 %v640, %v1496
        %v1543 = vsub.f32 %v642, %v1505
        %v1544 = vsub.f32 %v646, %v1496
        %v1545 = vsub.f32 %v648, %v1505
        %v1546 = vsub.f32 %v652, %v1496
        %v1547 = vsub.f32 %v654, %v1505
        %v1548 = vsub.f32 %v658, %v1514
        %v1549 = vsub.f32 %v660, %v1523
        %v1550 = vsub.f32 %v664, %v1514
        %v1551 = vsub.f32 %v666, %v1523
        %v1552 = vsub.f32 %v670, %v1514
        %v1553 = vsub.f32 %v672, %v1523
        %v1554 = vsub.f32 %v676, %v1514
        %v1555 = vsub.f32 %v678, %v1523
        %v1556 = vmul.f32 %v1524, 1.442695
        %v1557 = vpow.pop %v1556
        %v1558 = vmul.f32 %v1525, 1.442695
        %v1559 = vpow.pop %v1558
        %v1560 = vmul.f32 %v1526, 1.442695
        %v1561 = vpow.pop %v1560
        %v1562 = vmul.f32 %v1527, 1.442695
        %v1563 = vpow.pop %v1562
        %v1564 = vmul.f32 %v1528, 1.442695
        %v1565 = vpow.pop %v1564
        %v1566 = vmul.f32 %v1529, 1.442695
        %v1567 = vpow.pop %v1566
        %v1568 = vmul.f32 %v1530, 1.442695
        %v1569 = vpow.pop %v1568
        %v1570 = vmul.f32 %v1531, 1.442695
        %v1571 = vpow.pop %v1570
        %v1572 = vmul.f32 %v1532, 1.442695
        %v1573 = vpow.pop %v1572
        %v1574 = vmul.f32 %v1533, 1.442695
        %v1575 = vpow.pop %v1574
        %v1576 = vmul.f32 %v1534, 1.442695
        %v1577 = vpow.pop %v1576
        %v1578 = vmul.f32 %v1535, 1.442695
        %v1579 = vpow.pop %v1578
        %v1580 = vmul.f32 %v1536, 1.442695
        %v1581 = vpow.pop %v1580
        %v1582 = vmul.f32 %v1537, 1.442695
        %v1583 = vpow.pop %v1582
        %v1584 = vmul.f32 %v1538, 1.442695
        %v1585 = vpow.pop %v1584
        %v1586 = vmul.f32 %v1539, 1.442695
        %v1587 = vpow.pop %v1586
        %v1588 = vmul.f32 %v1540, 1.442695
        %v1589 = vpow.pop %v1588
        %v1590 = vmul.f32 %v1541, 1.442695
        %v1591 = vpow.pop %v1590
        %v1592 = vmul.f32 %v1542, 1.442695
        %v1593 = vpow.pop %v1592
        %v1594 = vmul.f32 %v1543, 1.442695
        %v1595 = vpow.pop %v1594
        %v1596 = vmul.f32 %v1544, 1.442695
        %v1597 = vpow.pop %v1596
        %v1598 = vmul.f32 %v1545, 1.442695
        %v1599 = vpow.pop %v1598
        %v1600 = vmul.f32 %v1546, 1.442695
        %v1601 = vpow.pop %v1600
        %v1602 = vmul.f32 %v1547, 1.442695
        %v1603 = vpow.pop %v1602
        %v1604 = vmul.f32 %v1548, 1.442695
        %v1605 = vpow.pop %v1604
        %v1606 = vmul.f32 %v1549, 1.442695
        %v1607 = vpow.pop %v1606
        %v1608 = vmul.f32 %v1550, 1.442695
        %v1609 = vpow.pop %v1608
        %v1610 = vmul.f32 %v1551, 1.442695
        %v1611 = vpow.pop %v1610
        %v1612 = vmul.f32 %v1552, 1.442695
        %v1613 = vpow.pop %v1612
        %v1614 = vmul.f32 %v1553, 1.442695
        %v1615 = vpow.pop %v1614
        %v1616 = vmul.f32 %v1554, 1.442695
        %v1617 = vpow.pop %v1616
        %v1618 = vmul.f32 %v1555, 1.442695
        %v1619 = vpow.pop %v1618
        %v1620 = vadd.f32 %v1557, %v1561
        %v1621 = vadd.f32 %v1620, %v1565
        %v1622 = vadd.f32 %v1621, %v1569
        %v1623 = vrot.slane %v1622, 4
        %v1624 = vadd.f32 %v1622, %v1623
        %v1625 = vrot.slane %v1624, 2
        %v1626 = vadd.f32 %v1624, %v1625
        %v1627 = vrot.slane %v1626, 1
        %v1628 = vadd.f32 %v1626, %v1627
        %v1629 = vadd.f32 %v1559, %v1563
        %v1630 = vadd.f32 %v1629, %v1567
        %v1631 = vadd.f32 %v1630, %v1571
        %v1632 = vrot.slane %v1631, 4
        %v1633 = vadd.f32 %v1631, %v1632
        %v1634 = vrot.slane %v1633, 2
        %v1635 = vadd.f32 %v1633, %v1634
        %v1636 = vrot.slane %v1635, 1
        %v1637 = vadd.f32 %v1635, %v1636
        %v1638 = vadd.f32 %v1573, %v1577
        %v1639 = vadd.f32 %v1638, %v1581
        %v1640 = vadd.f32 %v1639, %v1585
        %v1641 = vrot.slane %v1640, 4
        %v1642 = vadd.f32 %v1640, %v1641
        %v1643 = vrot.slane %v1642, 2
        %v1644 = vadd.f32 %v1642, %v1643
        %v1645 = vrot.slane %v1644, 1
        %v1646 = vadd.f32 %v1644, %v1645
        %v1647 = vadd.f32 %v1575, %v1579
        %v1648 = vadd.f32 %v1647, %v1583
        %v1649 = vadd.f32 %v1648, %v1587
        %v1650 = vrot.slane %v1649, 4
        %v1651 = vadd.f32 %v1649, %v1650
        %v1652 = vrot.slane %v1651, 2
        %v1653 = vadd.f32 %v1651, %v1652
        %v1654 = vrot.slane %v1653, 1
        %v1655 = vadd.f32 %v1653, %v1654
        %v1656 = vadd.f32 %v1589, %v1593
        %v1657 = vadd.f32 %v1656, %v1597
        %v1658 = vadd.f32 %v1657, %v1601
        %v1659 = vrot.slane %v1658, 4
        %v1660 = vadd.f32 %v1658, %v1659
        %v1661 = vrot.slane %v1660, 2
        %v1662 = vadd.f32 %v1660, %v1661
        %v1663 = vrot.slane %v1662, 1
        %v1664 = vadd.f32 %v1662, %v1663
        %v1665 = vadd.f32 %v1591, %v1595
        %v1666 = vadd.f32 %v1665, %v1599
        %v1667 = vadd.f32 %v1666, %v1603
        %v1668 = vrot.slane %v1667, 4
        %v1669 = vadd.f32 %v1667, %v1668
        %v1670 = vrot.slane %v1669, 2
        %v1671 = vadd.f32 %v1669, %v1670
        %v1672 = vrot.slane %v1671, 1
        %v1673 = vadd.f32 %v1671, %v1672
        %v1674 = vadd.f32 %v1605, %v1609
        %v1675 = vadd.f32 %v1674, %v1613
        %v1676 = vadd.f32 %v1675, %v1617
        %v1677 = vrot.slane %v1676, 4
        %v1678 = vadd.f32 %v1676, %v1677
        %v1679 = vrot.slane %v1678, 2
        %v1680 = vadd.f32 %v1678, %v1679
        %v1681 = vrot.slane %v1680, 1
        %v1682 = vadd.f32 %v1680, %v1681
        %v1683 = vadd.f32 %v1607, %v1611
        %v1684 = vadd.f32 %v1683, %v1615
        %v1685 = vadd.f32 %v1684, %v1619
        %v1686 = vrot.slane %v1685, 4
        %v1687 = vadd.f32 %v1685, %v1686
        %v1688 = vrot.slane %v1687, 2
        %v1689 = vadd.f32 %v1687, %v1688
        %v1690 = vrot.slane %v1689, 1
        %v1691 = vadd.f32 %v1689, %v1690
        %v1692 = vrcp.pop %v1628
        %v1693 = vrcp.pop %v1637
        %v1694 = vrcp.pop %v1646
        %v1695 = vrcp.pop %v1655
        %v1696 = vrcp.pop %v1664
        %v1697 = vrcp.pop %v1673
        %v1698 = vrcp.pop %v1682
        %v1699 = vrcp.pop %v1691
        %v1700 = vmul.f32 %v1692, 0.17677669
        %v1701 = vmul.f32 %v1693, 0.17677669
        %v1702 = vmul.f32 %v1694, 0.17677669
        %v1703 = vmul.f32 %v1695, 0.17677669
        %v1704 = vmul.f32 %v1696, 0.17677669
        %v1705 = vmul.f32 %v1697, 0.17677669
        %v1706 = vmul.f32 %v1698, 0.17677669
        %v1707 = vmul.f32 %v1699, 0.17677669
        %v1708 = vmul.f32 %v1557, %v1700
        %v1709 = vmul.f32 %v1559, %v1701
        %v1710 = vmul.f32 %v1561, %v1700
        %v1711 = vmul.f32 %v1563, %v1701
        %v1712 = vmul.f32 %v1565, %v1700
        %v1713 = vmul.f32 %v1567, %v1701
        %v1714 = vmul.f32 %v1569, %v1700
        %v1715 = vmul.f32 %v1571, %v1701
        %v1716 = vmul.f32 %v1573, %v1702
        %v1717 = vmul.f32 %v1575, %v1703
        %v1718 = vmul.f32 %v1577, %v1702
        %v1719 = vmul.f32 %v1579, %v1703
        %v1720 = vmul.f32 %v1581, %v1702
        %v1721 = vmul.f32 %v1583, %v1703
        %v1722 = vmul.f32 %v1585, %v1702
        %v1723 = vmul.f32 %v1587, %v1703
        %v1724 = vmul.f32 %v1589, %v1704
        %v1725 = vmul.f32 %v1591, %v1705
        %v1726 = vmul.f32 %v1593, %v1704
        %v1727 = vmul.f32 %v1595, %v1705
        %v1728 = vmul.f32 %v1597, %v1704
        %v1729 = vmul.f32 %v1599, %v1705
        %v1730 = vmul.f32 %v1601, %v1704
        %v1731 = vmul.f32 %v1603, %v1705
        %v1732 = vmul.f32 %v1605, %v1706
        %v1733 = vmul.f32 %v1607, %v1707
        %v1734 = vmul.f32 %v1609, %v1706
        %v1735 = vmul.f32 %v1611, %v1707
        %v1736 = vmul.f32 %v1613, %v1706
        %v1737 = vmul.f32 %v1615, %v1707
        %v1738 = vmul.f32 %v1617, %v1706
        %v1739 = vmul.f32 %v1619, %v1707
        %1740 = vxpose.xlu0.b32.start [1/16] %v1179, 128
        %1741 = vxpose.xlu0.b32.cont [2/16] %v1184, 128
        %1742 = vxpose.xlu0.b32.cont [3/16] %v1189, 128
        %1743 = vxpose.xlu0.b32.cont [4/16] %v1194, 128
        %1744 = vxpose.xlu0.b32.cont [5/16] 0.0, 128
        %1745 = vxpose.xlu0.b32.cont [6/16] 0.0, 128
        %1746 = vxpose.xlu0.b32.cont [7/16] 0.0, 128
        %1747 = vxpose.xlu0.b32.cont [8/16] 0.0, 128
        %1748 = vxpose.xlu0.b32.cont [9/16] 0.0, 128
        %1749 = vxpose.xlu0.b32.cont [10/16] 0.0, 128
        %1750 = vxpose.xlu0.b32.cont [11/16] 0.0, 128
        %1751 = vxpose.xlu0.b32.cont [12/16] 0.0, 128
        %1752 = vxpose.xlu0.b32.cont [13/16] 0.0, 128
        %1753 = vxpose.xlu0.b32.cont [14/16] 0.0, 128
        %1754 = vxpose.xlu0.b32.cont [15/16] 0.0, 128
        %1755 = vxpose.xlu0.b32.end [16/16] 0.0, 128
        %v1756 = vpop.trf.xlu0
        %v1757 = vpop.trf.xlu0
        %v1758 = vpop.trf.xlu0
        %v1759 = vpop.trf.xlu0
        %v1760 = vpop.trf.xlu0
        %v1761 = vpop.trf.xlu0
        %v1762 = vpop.trf.xlu0
        %v1763 = vpop.trf.xlu0
        %v1764 = vpop.trf.xlu0
        %v1765 = vpop.trf.xlu0
        %v1766 = vpop.trf.xlu0
        %v1767 = vpop.trf.xlu0
        %v1768 = vpop.trf.xlu0
        %v1769 = vpop.trf.xlu0
        %v1770 = vpop.trf.xlu0
        %v1771 = vpop.trf.xlu0
        %v1773 = vsel %vm374, %v1756, 0
        %v1776 = vsel %vm374, %v1757, 0
        %v1779 = vsel %vm374, %v1758, 0
        %v1782 = vsel %vm374, %v1759, 0
        %1784 = vmatprep.subr.mxu0 0.0
        %1785 = vmatpush1.msra.mxu0 0.0
        %1786 = vmatprep.subr.mxu0 0.0
        %1787 = vmatpush1.msra.mxu0 0.0
        %1788 = vmatprep.subr.mxu0 0.0
        %1789 = vmatpush1.msra.mxu0 0.0
        %1790 = vmatprep.subr.mxu0 0.0
        %1791 = vmatpush1.msra.mxu0 0.0
        %1792 = vmatprep.subr.mxu0 0.0
        %1793 = vmatpush1.msra.mxu0 0.0
        %1794 = vmatprep.subr.mxu0 0.0
        %1795 = vmatpush1.msra.mxu0 0.0
        %1796 = vmatprep.subr.mxu0 0.0
        %1797 = vmatpush1.msra.mxu0 0.0
        %1798 = vmatprep.subr.mxu0 0.0
        %1799 = vmatpush1.msra.mxu0 0.0
        %1800 = vmatprep.subr.mxu0 0.0
        %1801 = vmatpush1.msra.mxu0 0.0
        %1802 = vmatprep.subr.mxu0 0.0
        %1803 = vmatpush1.msra.mxu0 0.0
        %1804 = vmatprep.subr.mxu0 0.0
        %1805 = vmatpush1.msra.mxu0 0.0
        %1806 = vmatprep.subr.mxu0 0.0
        %1807 = vmatpush1.msra.mxu0 0.0
        %1808 = vmatprep.subr.mxu0 %v1715
        %1809 = vmatpush1.msra.mxu0 %v1714
        %1810 = vmatprep.subr.mxu0 %v1713
        %1811 = vmatpush1.msra.mxu0 %v1712
        %1812 = vmatprep.subr.mxu0 %v1711
        %1813 = vmatpush1.msra.mxu0 %v1710
        %1814 = vmatprep.subr.mxu0 %v1709
        %1815 = vmatpush1.msra.mxu0 %v1708
        %1816 = vmatprep.subr.mxu0 0.0
        %1817 = vmatpush2.msra.mxu0 0.0
        %1818 = vmatprep.subr.mxu0 0.0
        %1819 = vmatpush2.msra.mxu0 0.0
        %1820 = vmatprep.subr.mxu0 0.0
        %1821 = vmatpush2.msra.mxu0 0.0
        %1822 = vmatprep.subr.mxu0 0.0
        %1823 = vmatpush2.msra.mxu0 0.0
        %1824 = vmatprep.subr.mxu0 0.0
        %1825 = vmatpush2.msra.mxu0 0.0
        %1826 = vmatprep.subr.mxu0 0.0
        %1827 = vmatpush2.msra.mxu0 0.0
        %1828 = vmatprep.subr.mxu0 0.0
        %1829 = vmatpush2.msra.mxu0 0.0
        %1830 = vmatprep.subr.mxu0 0.0
        %1831 = vmatpush2.msra.mxu0 0.0
        %1832 = vmatprep.subr.mxu0 0.0
        %1833 = vmatpush2.msra.mxu0 0.0
        %1834 = vmatprep.subr.mxu0 0.0
        %1835 = vmatpush2.msra.mxu0 0.0
        %1836 = vmatprep.subr.mxu0 0.0
        %1837 = vmatpush2.msra.mxu0 0.0
        %1838 = vmatprep.subr.mxu0 0.0
        %1839 = vmatpush2.msra.mxu0 0.0
        %1840 = vmatprep.subr.mxu0 0.0
        %1841 = vmatpush2.msra.mxu0 0.0
        %1842 = vmatprep.subr.mxu0 0.0
        %1843 = vmatpush2.msra.mxu0 0.0
        %1844 = vmatprep.subr.mxu0 0.0
        %1845 = vmatpush2.msra.mxu0 0.0
        %1846 = vmatprep.subr.mxu0 0.0
        %1847 = vmatpush2.msra.mxu0 0.0
        %1848 = vmatprep.mubr.f32.mxu0 0.0
        %1849 = vmatmul.mubr.f32.gmra.mxu0 %v1773
        %v1850 = vpop.f32.mrf.mxu0
        %v1851 = vadd.f32 0.0, %v1850
        %v1852 = vpop.f32.mrf.mxu0
        %v1853 = vadd.f32 0.0, %v1852
        %1854 = vmatprep.mubr.f32.mxu0 0.0
        %1855 = vmatmul.mubr.f32.gmra.mxu0 %v1776
        %v1856 = vpop.f32.mrf.mxu0
        %v1857 = vadd.f32 0.0, %v1856
        %v1858 = vpop.f32.mrf.mxu0
        %v1859 = vadd.f32 0.0, %v1858
        %1860 = vmatprep.mubr.f32.mxu0 0.0
        %1861 = vmatmul.mubr.f32.gmra.mxu0 %v1779
        %v1862 = vpop.f32.mrf.mxu0
        %v1863 = vadd.f32 0.0, %v1862
        %v1864 = vpop.f32.mrf.mxu0
        %v1865 = vadd.f32 0.0, %v1864
        %1866 = vmatprep.mubr.f32.mxu0 0.0
        %1867 = vmatmul.mubr.f32.gmra.mxu0 %v1782
        %v1868 = vpop.f32.mrf.mxu0
        %v1869 = vadd.f32 0.0, %v1868
        %v1870 = vpop.f32.mrf.mxu0
        %v1871 = vadd.f32 0.0, %v1870
        %1872 = vdwg.mxu0
        %1873 = vxpose.xlu0.b32.start [1/16] %v1264, 128
        %1874 = vxpose.xlu0.b32.cont [2/16] %v1269, 128
        %1875 = vxpose.xlu0.b32.cont [3/16] %v1274, 128
        %1876 = vxpose.xlu0.b32.cont [4/16] %v1279, 128
        %1877 = vxpose.xlu0.b32.cont [5/16] 0.0, 128
        %1878 = vxpose.xlu0.b32.cont [6/16] 0.0, 128
        %1879 = vxpose.xlu0.b32.cont [7/16] 0.0, 128
        %1880 = vxpose.xlu0.b32.cont [8/16] 0.0, 128
        %1881 = vxpose.xlu0.b32.cont [9/16] 0.0, 128
        %1882 = vxpose.xlu0.b32.cont [10/16] 0.0, 128
        %1883 = vxpose.xlu0.b32.cont [11/16] 0.0, 128
        %1884 = vxpose.xlu0.b32.cont [12/16] 0.0, 128
        %1885 = vxpose.xlu0.b32.cont [13/16] 0.0, 128
        %1886 = vxpose.xlu0.b32.cont [14/16] 0.0, 128
        %1887 = vxpose.xlu0.b32.cont [15/16] 0.0, 128
        %1888 = vxpose.xlu0.b32.end [16/16] 0.0, 128
        %v1889 = vpop.trf.xlu0
        %v1890 = vpop.trf.xlu0
        %v1891 = vpop.trf.xlu0
        %v1892 = vpop.trf.xlu0
        %v1893 = vpop.trf.xlu0
        %v1894 = vpop.trf.xlu0
        %v1895 = vpop.trf.xlu0
        %v1896 = vpop.trf.xlu0
        %v1897 = vpop.trf.xlu0
        %v1898 = vpop.trf.xlu0
        %v1899 = vpop.trf.xlu0
        %v1900 = vpop.trf.xlu0
        %v1901 = vpop.trf.xlu0
        %v1902 = vpop.trf.xlu0
        %v1903 = vpop.trf.xlu0
        %v1904 = vpop.trf.xlu0
        %v1906 = vsel %vm374, %v1889, 0
        %v1909 = vsel %vm374, %v1890, 0
        %v1912 = vsel %vm374, %v1891, 0
        %v1915 = vsel %vm374, %v1892, 0
        %1917 = vmatprep.subr.mxu0 0.0
        %1918 = vmatpush1.msra.mxu0 0.0
        %1919 = vmatprep.subr.mxu0 0.0
        %1920 = vmatpush1.msra.mxu0 0.0
        %1921 = vmatprep.subr.mxu0 0.0
        %1922 = vmatpush1.msra.mxu0 0.0
        %1923 = vmatprep.subr.mxu0 0.0
        %1924 = vmatpush1.msra.mxu0 0.0
        %1925 = vmatprep.subr.mxu0 0.0
        %1926 = vmatpush1.msra.mxu0 0.0
        %1927 = vmatprep.subr.mxu0 0.0
        %1928 = vmatpush1.msra.mxu0 0.0
        %1929 = vmatprep.subr.mxu0 0.0
        %1930 = vmatpush1.msra.mxu0 0.0
        %1931 = vmatprep.subr.mxu0 0.0
        %1932 = vmatpush1.msra.mxu0 0.0
        %1933 = vmatprep.subr.mxu0 0.0
        %1934 = vmatpush1.msra.mxu0 0.0
        %1935 = vmatprep.subr.mxu0 0.0
        %1936 = vmatpush1.msra.mxu0 0.0
        %1937 = vmatprep.subr.mxu0 0.0
        %1938 = vmatpush1.msra.mxu0 0.0
        %1939 = vmatprep.subr.mxu0 0.0
        %1940 = vmatpush1.msra.mxu0 0.0
        %1941 = vmatprep.subr.mxu0 %v1723
        %1942 = vmatpush1.msra.mxu0 %v1722
        %1943 = vmatprep.subr.mxu0 %v1721
        %1944 = vmatpush1.msra.mxu0 %v1720
        %1945 = vmatprep.subr.mxu0 %v1719
        %1946 = vmatpush1.msra.mxu0 %v1718
        %1947 = vmatprep.subr.mxu0 %v1717
        %1948 = vmatpush1.msra.mxu0 %v1716
        %1949 = vmatprep.subr.mxu0 0.0
        %1950 = vmatpush2.msra.mxu0 0.0
        %1951 = vmatprep.subr.mxu0 0.0
        %1952 = vmatpush2.msra.mxu0 0.0
        %1953 = vmatprep.subr.mxu0 0.0
        %1954 = vmatpush2.msra.mxu0 0.0
        %1955 = vmatprep.subr.mxu0 0.0
        %1956 = vmatpush2.msra.mxu0 0.0
        %1957 = vmatprep.subr.mxu0 0.0
        %1958 = vmatpush2.msra.mxu0 0.0
        %1959 = vmatprep.subr.mxu0 0.0
        %1960 = vmatpush2.msra.mxu0 0.0
        %1961 = vmatprep.subr.mxu0 0.0
        %1962 = vmatpush2.msra.mxu0 0.0
        %1963 = vmatprep.subr.mxu0 0.0
        %1964 = vmatpush2.msra.mxu0 0.0
        %1965 = vmatprep.subr.mxu0 0.0
        %1966 = vmatpush2.msra.mxu0 0.0
        %1967 = vmatprep.subr.mxu0 0.0
        %1968 = vmatpush2.msra.mxu0 0.0
        %1969 = vmatprep.subr.mxu0 0.0
        %1970 = vmatpush2.msra.mxu0 0.0
        %1971 = vmatprep.subr.mxu0 0.0
        %1972 = vmatpush2.msra.mxu0 0.0
        %1973 = vmatprep.subr.mxu0 0.0
        %1974 = vmatpush2.msra.mxu0 0.0
        %1975 = vmatprep.subr.mxu0 0.0
        %1976 = vmatpush2.msra.mxu0 0.0
        %1977 = vmatprep.subr.mxu0 0.0
        %1978 = vmatpush2.msra.mxu0 0.0
        %1979 = vmatprep.subr.mxu0 0.0
        %1980 = vmatpush2.msra.mxu0 0.0
        %1981 = vmatprep.mubr.f32.mxu0 0.0
        %1982 = vmatmul.mubr.f32.gmra.mxu0 %v1906
        %v1983 = vpop.f32.mrf.mxu0
        %v1984 = vadd.f32 0.0, %v1983
        %v1985 = vpop.f32.mrf.mxu0
        %v1986 = vadd.f32 0.0, %v1985
        %1987 = vmatprep.mubr.f32.mxu0 0.0
        %1988 = vmatmul.mubr.f32.gmra.mxu0 %v1909
        %v1989 = vpop.f32.mrf.mxu0
        %v1990 = vadd.f32 0.0, %v1989
        %v1991 = vpop.f32.mrf.mxu0
        %v1992 = vadd.f32 0.0, %v1991
        %1993 = vmatprep.mubr.f32.mxu0 0.0
        %1994 = vmatmul.mubr.f32.gmra.mxu0 %v1912
        %v1995 = vpop.f32.mrf.mxu0
        %v1996 = vadd.f32 0.0, %v1995
        %v1997 = vpop.f32.mrf.mxu0
        %v1998 = vadd.f32 0.0, %v1997
        %1999 = vmatprep.mubr.f32.mxu0 0.0
        %2000 = vmatmul.mubr.f32.gmra.mxu0 %v1915
        %v2001 = vpop.f32.mrf.mxu0
        %v2002 = vadd.f32 0.0, %v2001
        %v2003 = vpop.f32.mrf.mxu0
        %v2004 = vadd.f32 0.0, %v2003
        %2005 = vdwg.mxu0
        %2006 = vxpose.xlu0.b32.start [1/16] %v1349, 128
        %2007 = vxpose.xlu0.b32.cont [2/16] %v1354, 128
        %2008 = vxpose.xlu0.b32.cont [3/16] %v1359, 128
        %2009 = vxpose.xlu0.b32.cont [4/16] %v1364, 128
        %2010 = vxpose.xlu0.b32.cont [5/16] 0.0, 128
        %2011 = vxpose.xlu0.b32.cont [6/16] 0.0, 128
        %2012 = vxpose.xlu0.b32.cont [7/16] 0.0, 128
        %2013 = vxpose.xlu0.b32.cont [8/16] 0.0, 128
        %2014 = vxpose.xlu0.b32.cont [9/16] 0.0, 128
        %2015 = vxpose.xlu0.b32.cont [10/16] 0.0, 128
        %2016 = vxpose.xlu0.b32.cont [11/16] 0.0, 128
        %2017 = vxpose.xlu0.b32.cont [12/16] 0.0, 128
        %2018 = vxpose.xlu0.b32.cont [13/16] 0.0, 128
        %2019 = vxpose.xlu0.b32.cont [14/16] 0.0, 128
        %2020 = vxpose.xlu0.b32.cont [15/16] 0.0, 128
        %2021 = vxpose.xlu0.b32.end [16/16] 0.0, 128
        %v2022 = vpop.trf.xlu0
        %v2023 = vpop.trf.xlu0
        %v2024 = vpop.trf.xlu0
        %v2025 = vpop.trf.xlu0
        %v2026 = vpop.trf.xlu0
        %v2027 = vpop.trf.xlu0
        %v2028 = vpop.trf.xlu0
        %v2029 = vpop.trf.xlu0
        %v2030 = vpop.trf.xlu0
        %v2031 = vpop.trf.xlu0
        %v2032 = vpop.trf.xlu0
        %v2033 = vpop.trf.xlu0
        %v2034 = vpop.trf.xlu0
        %v2035 = vpop.trf.xlu0
        %v2036 = vpop.trf.xlu0
        %v2037 = vpop.trf.xlu0
        %v2039 = vsel %vm374, %v2022, 0
        %v2042 = vsel %vm374, %v2023, 0
        %v2045 = vsel %vm374, %v2024, 0
        %v2048 = vsel %vm374, %v2025, 0
        %2050 = vmatprep.subr.mxu0 0.0
        %2051 = vmatpush1.msra.mxu0 0.0
        %2052 = vmatprep.subr.mxu0 0.0
        %2053 = vmatpush1.msra.mxu0 0.0
        %2054 = vmatprep.subr.mxu0 0.0
        %2055 = vmatpush1.msra.mxu0 0.0
        %2056 = vmatprep.subr.mxu0 0.0
        %2057 = vmatpush1.msra.mxu0 0.0
        %2058 = vmatprep.subr.mxu0 0.0
        %2059 = vmatpush1.msra.mxu0 0.0
        %2060 = vmatprep.subr.mxu0 0.0
        %2061 = vmatpush1.msra.mxu0 0.0
        %2062 = vmatprep.subr.mxu0 0.0
        %2063 = vmatpush1.msra.mxu0 0.0
        %2064 = vmatprep.subr.mxu0 0.0
        %2065 = vmatpush1.msra.mxu0 0.0
        %2066 = vmatprep.subr.mxu0 0.0
        %2067 = vmatpush1.msra.mxu0 0.0
        %2068 = vmatprep.subr.mxu0 0.0
        %2069 = vmatpush1.msra.mxu0 0.0
        %2070 = vmatprep.subr.mxu0 0.0
        %2071 = vmatpush1.msra.mxu0 0.0
        %2072 = vmatprep.subr.mxu0 0.0
        %2073 = vmatpush1.msra.mxu0 0.0
        %2074 = vmatprep.subr.mxu0 %v1731
        %2075 = vmatpush1.msra.mxu0 %v1730
        %2076 = vmatprep.subr.mxu0 %v1729
        %2077 = vmatpush1.msra.mxu0 %v1728
        %2078 = vmatprep.subr.mxu0 %v1727
        %2079 = vmatpush1.msra.mxu0 %v1726
        %2080 = vmatprep.subr.mxu0 %v1725
        %2081 = vmatpush1.msra.mxu0 %v1724
        %2082 = vmatprep.subr.mxu0 0.0
        %2083 = vmatpush2.msra.mxu0 0.0
        %2084 = vmatprep.subr.mxu0 0.0
        %2085 = vmatpush2.msra.mxu0 0.0
        %2086 = vmatprep.subr.mxu0 0.0
        %2087 = vmatpush2.msra.mxu0 0.0
        %2088 = vmatprep.subr.mxu0 0.0
        %2089 = vmatpush2.msra.mxu0 0.0
        %2090 = vmatprep.subr.mxu0 0.0
        %2091 = vmatpush2.msra.mxu0 0.0
        %2092 = vmatprep.subr.mxu0 0.0
        %2093 = vmatpush2.msra.mxu0 0.0
        %2094 = vmatprep.subr.mxu0 0.0
        %2095 = vmatpush2.msra.mxu0 0.0
        %2096 = vmatprep.subr.mxu0 0.0
        %2097 = vmatpush2.msra.mxu0 0.0
        %2098 = vmatprep.subr.mxu0 0.0
        %2099 = vmatpush2.msra.mxu0 0.0
        %2100 = vmatprep.subr.mxu0 0.0
        %2101 = vmatpush2.msra.mxu0 0.0
        %2102 = vmatprep.subr.mxu0 0.0
        %2103 = vmatpush2.msra.mxu0 0.0
        %2104 = vmatprep.subr.mxu0 0.0
        %2105 = vmatpush2.msra.mxu0 0.0
        %2106 = vmatprep.subr.mxu0 0.0
        %2107 = vmatpush2.msra.mxu0 0.0
        %2108 = vmatprep.subr.mxu0 0.0
        %2109 = vmatpush2.msra.mxu0 0.0
        %2110 = vmatprep.subr.mxu0 0.0
        %2111 = vmatpush2.msra.mxu0 0.0
        %2112 = vmatprep.subr.mxu0 0.0
        %2113 = vmatpush2.msra.mxu0 0.0
        %2114 = vmatprep.mubr.f32.mxu0 0.0
        %2115 = vmatmul.mubr.f32.gmra.mxu0 %v2039
        %v2116 = vpop.f32.mrf.mxu0
        %v2117 = vadd.f32 0.0, %v2116
        %v2118 = vpop.f32.mrf.mxu0
        %v2119 = vadd.f32 0.0, %v2118
        %2120 = vmatprep.mubr.f32.mxu0 0.0
        %2121 = vmatmul.mubr.f32.gmra.mxu0 %v2042
        %v2122 = vpop.f32.mrf.mxu0
        %v2123 = vadd.f32 0.0, %v2122
        %v2124 = vpop.f32.mrf.mxu0
        %v2125 = vadd.f32 0.0, %v2124
        %2126 = vmatprep.mubr.f32.mxu0 0.0
        %2127 = vmatmul.mubr.f32.gmra.mxu0 %v2045
        %v2128 = vpop.f32.mrf.mxu0
        %v2129 = vadd.f32 0.0, %v2128
        %v2130 = vpop.f32.mrf.mxu0
        %v2131 = vadd.f32 0.0, %v2130
        %2132 = vmatprep.mubr.f32.mxu0 0.0
        %2133 = vmatmul.mubr.f32.gmra.mxu0 %v2048
        %v2134 = vpop.f32.mrf.mxu0
        %v2135 = vadd.f32 0.0, %v2134
        %v2136 = vpop.f32.mrf.mxu0
        %v2137 = vadd.f32 0.0, %v2136
        %2138 = vdwg.mxu0
        %2139 = vxpose.xlu0.b32.start [1/16] %v1434, 128
        %2140 = vxpose.xlu0.b32.cont [2/16] %v1439, 128
        %2141 = vxpose.xlu0.b32.cont [3/16] %v1444, 128
        %2142 = vxpose.xlu0.b32.cont [4/16] %v1449, 128
        %2143 = vxpose.xlu0.b32.cont [5/16] 0.0, 128
        %2144 = vxpose.xlu0.b32.cont [6/16] 0.0, 128
        %2145 = vxpose.xlu0.b32.cont [7/16] 0.0, 128
        %2146 = vxpose.xlu0.b32.cont [8/16] 0.0, 128
        %2147 = vxpose.xlu0.b32.cont [9/16] 0.0, 128
        %2148 = vxpose.xlu0.b32.cont [10/16] 0.0, 128
        %2149 = vxpose.xlu0.b32.cont [11/16] 0.0, 128
        %2150 = vxpose.xlu0.b32.cont [12/16] 0.0, 128
        %2151 = vxpose.xlu0.b32.cont [13/16] 0.0, 128
        %2152 = vxpose.xlu0.b32.cont [14/16] 0.0, 128
        %2153 = vxpose.xlu0.b32.cont [15/16] 0.0, 128
        %2154 = vxpose.xlu0.b32.end [16/16] 0.0, 128
        %v2155 = vpop.trf.xlu0
        %v2156 = vpop.trf.xlu0
        %v2157 = vpop.trf.xlu0
        %v2158 = vpop.trf.xlu0
        %v2159 = vpop.trf.xlu0
        %v2160 = vpop.trf.xlu0
        %v2161 = vpop.trf.xlu0
        %v2162 = vpop.trf.xlu0
        %v2163 = vpop.trf.xlu0
        %v2164 = vpop.trf.xlu0
        %v2165 = vpop.trf.xlu0
        %v2166 = vpop.trf.xlu0
        %v2167 = vpop.trf.xlu0
        %v2168 = vpop.trf.xlu0
        %v2169 = vpop.trf.xlu0
        %v2170 = vpop.trf.xlu0
        %v2172 = vsel %vm374, %v2155, 0
        %v2175 = vsel %vm374, %v2156, 0
        %v2178 = vsel %vm374, %v2157, 0
        %v2181 = vsel %vm374, %v2158, 0
        %2183 = vmatprep.subr.mxu0 0.0
        %2184 = vmatpush1.msra.mxu0 0.0
        %2185 = vmatprep.subr.mxu0 0.0
        %2186 = vmatpush1.msra.mxu0 0.0
        %2187 = vmatprep.subr.mxu0 0.0
        %2188 = vmatpush1.msra.mxu0 0.0
        %2189 = vmatprep.subr.mxu0 0.0
        %2190 = vmatpush1.msra.mxu0 0.0
        %2191 = vmatprep.subr.mxu0 0.0
        %2192 = vmatpush1.msra.mxu0 0.0
        %2193 = vmatprep.subr.mxu0 0.0
        %2194 = vmatpush1.msra.mxu0 0.0
        %2195 = vmatprep.subr.mxu0 0.0
        %2196 = vmatpush1.msra.mxu0 0.0
        %2197 = vmatprep.subr.mxu0 0.0
        %2198 = vmatpush1.msra.mxu0 0.0
        %2199 = vmatprep.subr.mxu0 0.0
        %2200 = vmatpush1.msra.mxu0 0.0
        %2201 = vmatprep.subr.mxu0 0.0
        %2202 = vmatpush1.msra.mxu0 0.0
        %2203 = vmatprep.subr.mxu0 0.0
        %2204 = vmatpush1.msra.mxu0 0.0
        %2205 = vmatprep.subr.mxu0 0.0
        %2206 = vmatpush1.msra.mxu0 0.0
        %2207 = vmatprep.subr.mxu0 %v1739
        %2208 = vmatpush1.msra.mxu0 %v1738
        %2209 = vmatprep.subr.mxu0 %v1737
        %2210 = vmatpush1.msra.mxu0 %v1736
        %2211 = vmatprep.subr.mxu0 %v1735
        %2212 = vmatpush1.msra.mxu0 %v1734
        %2213 = vmatprep.subr.mxu0 %v1733
        %2214 = vmatpush1.msra.mxu0 %v1732
        %2215 = vmatprep.subr.mxu0 0.0
        %2216 = vmatpush2.msra.mxu0 0.0
        %2217 = vmatprep.subr.mxu0 0.0
        %2218 = vmatpush2.msra.mxu0 0.0
        %2219 = vmatprep.subr.mxu0 0.0
        %2220 = vmatpush2.msra.mxu0 0.0
        %2221 = vmatprep.subr.mxu0 0.0
        %2222 = vmatpush2.msra.mxu0 0.0
        %2223 = vmatprep.subr.mxu0 0.0
        %2224 = vmatpush2.msra.mxu0 0.0
        %2225 = vmatprep.subr.mxu0 0.0
        %2226 = vmatpush2.msra.mxu0 0.0
        %2227 = vmatprep.subr.mxu0 0.0
        %2228 = vmatpush2.msra.mxu0 0.0
        %2229 = vmatprep.subr.mxu0 0.0
        %2230 = vmatpush2.msra.mxu0 0.0
        %2231 = vmatprep.subr.mxu0 0.0
        %2232 = vmatpush2.msra.mxu0 0.0
        %2233 = vmatprep.subr.mxu0 0.0
        %2234 = vmatpush2.msra.mxu0 0.0
        %2235 = vmatprep.subr.mxu0 0.0
        %2236 = vmatpush2.msra.mxu0 0.0
        %2237 = vmatprep.subr.mxu0 0.0
        %2238 = vmatpush2.msra.mxu0 0.0
        %2239 = vmatprep.subr.mxu0 0.0
        %2240 = vmatpush2.msra.mxu0 0.0
        %2241 = vmatprep.subr.mxu0 0.0
        %2242 = vmatpush2.msra.mxu0 0.0
        %2243 = vmatprep.subr.mxu0 0.0
        %2244 = vmatpush2.msra.mxu0 0.0
        %2245 = vmatprep.subr.mxu0 0.0
        %2246 = vmatpush2.msra.mxu0 0.0
        %2247 = vmatprep.mubr.f32.mxu0 0.0
        %2248 = vmatmul.mubr.f32.gmra.mxu0 %v2172
        %v2249 = vpop.f32.mrf.mxu0
        %v2250 = vadd.f32 0.0, %v2249
        %v2251 = vpop.f32.mrf.mxu0
        %v2252 = vadd.f32 0.0, %v2251
        %2253 = vmatprep.mubr.f32.mxu0 0.0
        %2254 = vmatmul.mubr.f32.gmra.mxu0 %v2175
        %v2255 = vpop.f32.mrf.mxu0
        %v2256 = vadd.f32 0.0, %v2255
        %v2257 = vpop.f32.mrf.mxu0
        %v2258 = vadd.f32 0.0, %v2257
        %2259 = vmatprep.mubr.f32.mxu0 0.0
        %2260 = vmatmul.mubr.f32.gmra.mxu0 %v2178
        %v2261 = vpop.f32.mrf.mxu0
        %v2262 = vadd.f32 0.0, %v2261
        %v2263 = vpop.f32.mrf.mxu0
        %v2264 = vadd.f32 0.0, %v2263
        %2265 = vmatprep.mubr.f32.mxu0 0.0
        %2266 = vmatmul.mubr.f32.gmra.mxu0 %v2181
        %v2267 = vpop.f32.mrf.mxu0
        %v2268 = vadd.f32 0.0, %v2267
        %v2269 = vpop.f32.mrf.mxu0
        %v2270 = vadd.f32 0.0, %v2269
        %2271 = vdwg.mxu0
        %v2272 = vld [vmem:[%s2] sm:$0xff]
        %v2273 = vld [vmem:[%s2 + $0x8] sm:$0xff]
        %v2274 = vld [vmem:[%s2 + $0x10] sm:$0xff]
        %v2275 = vld [vmem:[%s2 + $0x18] sm:$0xff]
        %v2276 = vld [vmem:[%s3] sm:$0xff]
        %v2277 = vld [vmem:[%s3 + $0x8] sm:$0xff]
        %v2278 = vld [vmem:[%s3 + $0x10] sm:$0xff]
        %v2279 = vld [vmem:[%s3 + $0x18] sm:$0xff]
        %2281 = vset.pattern.permute.xlu0 0
        %2282 = vperm.xlu0 %2281, %v2276
        %v2283 = vpop.permute.xlu0 %2282
        %2286 = vset.pattern.permute.xlu0 0
        %2287 = vperm.xlu0 %2286, %v2277
        %v2288 = vpop.permute.xlu0 %2287
        %2291 = vset.pattern.permute.xlu0 0
        %2292 = vperm.xlu0 %2291, %v2278
        %v2293 = vpop.permute.xlu0 %2292
        %2296 = vset.pattern.permute.xlu0 0
        %2297 = vperm.xlu0 %2296, %v2279
        %v2298 = vpop.permute.xlu0 %2297
        %2300 = vmatprep.subr.mxu0 %v2270
        %2301 = vmatpush1.msra.mxu0 %v2268
        %2302 = vmatprep.subr.mxu0 %v2264
        %2303 = vmatpush1.msra.mxu0 %v2262
        %2304 = vmatprep.subr.mxu0 %v2258
        %2305 = vmatpush1.msra.mxu0 %v2256
        %2306 = vmatprep.subr.mxu0 %v2252
        %2307 = vmatpush1.msra.mxu0 %v2250
        %2308 = vmatprep.subr.mxu0 %v2137
        %2309 = vmatpush1.msra.mxu0 %v2135
        %2310 = vmatprep.subr.mxu0 %v2131
        %2311 = vmatpush1.msra.mxu0 %v2129
        %2312 = vmatprep.subr.mxu0 %v2125
        %2313 = vmatpush1.msra.mxu0 %v2123
        %2314 = vmatprep.subr.mxu0 %v2119
        %2315 = vmatpush1.msra.mxu0 %v2117
        %2316 = vmatprep.subr.mxu0 %v2004
        %2317 = vmatpush1.msra.mxu0 %v2002
        %2318 = vmatprep.subr.mxu0 %v1998
        %2319 = vmatpush1.msra.mxu0 %v1996
        %2320 = vmatprep.subr.mxu0 %v1992
        %2321 = vmatpush1.msra.mxu0 %v1990
        %2322 = vmatprep.subr.mxu0 %v1986
        %2323 = vmatpush1.msra.mxu0 %v1984
        %2324 = vmatprep.subr.mxu0 %v1871
        %2325 = vmatpush1.msra.mxu0 %v1869
        %2326 = vmatprep.subr.mxu0 %v1865
        %2327 = vmatpush1.msra.mxu0 %v1863
        %2328 = vmatprep.subr.mxu0 %v1859
        %2329 = vmatpush1.msra.mxu0 %v1857
        %2330 = vmatprep.subr.mxu0 %v1853
        %2331 = vmatpush1.msra.mxu0 %v1851
        %2332 = vmatprep.subr.mxu0 0.0
        %2333 = vmatpush2.msra.mxu0 0.0
        %2334 = vmatprep.subr.mxu0 0.0
        %2335 = vmatpush2.msra.mxu0 0.0
        %2336 = vmatprep.subr.mxu0 0.0
        %2337 = vmatpush2.msra.mxu0 0.0
        %2338 = vmatprep.subr.mxu0 0.0
        %2339 = vmatpush2.msra.mxu0 0.0
        %2340 = vmatprep.subr.mxu0 0.0
        %2341 = vmatpush2.msra.mxu0 0.0
        %2342 = vmatprep.subr.mxu0 0.0
        %2343 = vmatpush2.msra.mxu0 0.0
        %2344 = vmatprep.subr.mxu0 0.0
        %2345 = vmatpush2.msra.mxu0 0.0
        %2346 = vmatprep.subr.mxu0 0.0
        %2347 = vmatpush2.msra.mxu0 0.0
        %2348 = vmatprep.subr.mxu0 0.0
        %2349 = vmatpush2.msra.mxu0 0.0
        %2350 = vmatprep.subr.mxu0 0.0
        %2351 = vmatpush2.msra.mxu0 0.0
        %2352 = vmatprep.subr.mxu0 0.0
        %2353 = vmatpush2.msra.mxu0 0.0
        %2354 = vmatprep.subr.mxu0 0.0
        %2355 = vmatpush2.msra.mxu0 0.0
        %2356 = vmatprep.subr.mxu0 0.0
        %2357 = vmatpush2.msra.mxu0 0.0
        %2358 = vmatprep.subr.mxu0 0.0
        %2359 = vmatpush2.msra.mxu0 0.0
        %2360 = vmatprep.subr.mxu0 0.0
        %2361 = vmatpush2.msra.mxu0 0.0
        %2362 = vmatprep.subr.mxu0 0.0
        %2363 = vmatpush2.msra.mxu0 0.0
        %2364 = vmatprep.mubr.f32.mxu0 0.0
        %2365 = vmatmul.mubr.f32.gmra.mxu0 %v2272
        %v2366 = vpop.f32.mrf.mxu0
        %v2367 = vadd.f32 %v2283, %v2366
        %v2368 = vpop.f32.mrf.mxu0
        %v2369 = vadd.f32 %v2283, %v2368
        %2370 = vmatprep.mubr.f32.mxu0 0.0
        %2371 = vmatmul.mubr.f32.gmra.mxu0 %v2273
        %v2372 = vpop.f32.mrf.mxu0
        %v2373 = vadd.f32 %v2288, %v2372
        %v2374 = vpop.f32.mrf.mxu0
        %v2375 = vadd.f32 %v2288, %v2374
        %2376 = vmatprep.mubr.f32.mxu0 0.0
        %2377 = vmatmul.mubr.f32.gmra.mxu0 %v2274
        %v2378 = vpop.f32.mrf.mxu0
        %v2379 = vadd.f32 %v2293, %v2378
        %v2380 = vpop.f32.mrf.mxu0
        %v2381 = vadd.f32 %v2293, %v2380
        %2382 = vmatprep.mubr.f32.mxu0 0.0
        %2383 = vmatmul.mubr.f32.gmra.mxu0 %v2275
        %v2384 = vpop.f32.mrf.mxu0
        %v2385 = vadd.f32 %v2298, %v2384
        %v2386 = vpop.f32.mrf.mxu0
        %v2387 = vadd.f32 %v2298, %v2386
        %2388 = vdwg.mxu0
        %v2389 = vadd.f32 %v2367, %v2373
        %v2390 = vadd.f32 %v2389, %v2379
        %v2391 = vadd.f32 %v2390, %v2385
        %v2392 = vrot.slane %v2391, 4
        %v2393 = vadd.f32 %v2391, %v2392
        %v2394 = vrot.slane %v2393, 2
        %v2395 = vadd.f32 %v2393, %v2394
        %v2396 = vrot.slane %v2395, 1
        %v2397 = vadd.f32 %v2395, %v2396
        %v2398 = vadd.f32 %v2369, %v2375
        %v2399 = vadd.f32 %v2398, %v2381
        %v2400 = vadd.f32 %v2399, %v2387
        %v2401 = vrot.slane %v2400, 4
        %v2402 = vadd.f32 %v2400, %v2401
        %v2403 = vrot.slane %v2402, 2
        %v2404 = vadd.f32 %v2402, %v2403
        %v2405 = vrot.slane %v2404, 1
        %v2406 = vadd.f32 %v2404, %v2405
        %v2407 = vrcp.pop 32.0
        %v2408 = vmul.f32 %v2397, %v2407
        %v2409 = vmul.f32 %v2406, %v2407
        %v2410 = vsub.f32 %v2367, %v2408
        %v2411 = vsub.f32 %v2369, %v2409
        %v2412 = vsub.f32 %v2373, %v2408
        %v2413 = vsub.f32 %v2375, %v2409
        %v2414 = vsub.f32 %v2379, %v2408
        %v2415 = vsub.f32 %v2381, %v2409
        %v2416 = vsub.f32 %v2385, %v2408
        %v2417 = vsub.f32 %v2387, %v2409
        %v2418 = vmul.f32 %v2410, %v2410
        %v2419 = vmul.f32 %v2411, %v2411
        %v2420 = vmul.f32 %v2412, %v2412
        %v2421 = vmul.f32 %v2413, %v2413
        %v2422 = vmul.f32 %v2414, %v2414
        %v2423 = vmul.f32 %v2415, %v2415
        %v2424 = vmul.f32 %v2416, %v2416
        %v2425 = vmul.f32 %v2417, %v2417
        %v2426 = vadd.f32 %v2418, %v2420
        %v2427 = vadd.f32 %v2426, %v2422
        %v2428 = vadd.f32 %v2427, %v2424
        %v2429 = vrot.slane %v2428, 4
        %v2430 = vadd.f32 %v2428, %v2429
        %v2431 = vrot.slane %v2430, 2
        %v2432 = vadd.f32 %v2430, %v2431
        %v2433 = vrot.slane %v2432, 1
        %v2434 = vadd.f32 %v2432, %v2433
        %v2435 = vadd.f32 %v2419, %v2421
        %v2436 = vadd.f32 %v2435, %v2423
        %v2437 = vadd.f32 %v2436, %v2425
        %v2438 = vrot.slane %v2437, 4
        %v2439 = vadd.f32 %v2437, %v2438
        %v2440 = vrot.slane %v2439, 2
        %v2441 = vadd.f32 %v2439, %v2440
        %v2442 = vrot.slane %v2441, 1
        %v2443 = vadd.f32 %v2441, %v2442
        %v2444 = vmul.f32 %v2434, %v2407
        %v2445 = vmul.f32 %v2443, %v2407
        %v2446 = vld [vmem:[%s4] sm:$0xff]
        %v2447 = vld [vmem:[%s4 + $0x8] sm:$0xff]
        %v2448 = vld [vmem:[%s4 + $0x10] sm:$0xff]
        %v2449 = vld [vmem:[%s4 + $0x18] sm:$0xff]
        %v2450 = vadd.f32 %v2444, 1e-05
        %v2451 = vadd.f32 %v2445, 1e-05
        %v2452 = vrsqrt.pop %v2450
        %v2453 = vrsqrt.pop %v2451
        %v2454 = vmul.f32 %v2410, %v2452
        %v2455 = vmul.f32 %v2411, %v2453
        %v2456 = vmul.f32 %v2412, %v2452
        %v2457 = vmul.f32 %v2413, %v2453
        %v2458 = vmul.f32 %v2414, %v2452
        %v2459 = vmul.f32 %v2415, %v2453
        %v2460 = vmul.f32 %v2416, %v2452
        %v2461 = vmul.f32 %v2417, %v2453
        %2463 = vset.pattern.permute.xlu0 0
        %2464 = vperm.xlu0 %2463, %v2446
        %v2465 = vpop.permute.xlu0 %2464
        %2468 = vset.pattern.permute.xlu0 0
        %2469 = vperm.xlu0 %2468, %v2447
        %v2470 = vpop.permute.xlu0 %2469
        %2473 = vset.pattern.permute.xlu0 0
        %2474 = vperm.xlu0 %2473, %v2448
        %v2475 = vpop.permute.xlu0 %2474
        %2478 = vset.pattern.permute.xlu0 0
        %2479 = vperm.xlu0 %2478, %v2449
        %v2480 = vpop.permute.xlu0 %2479
        %v2482 = vmul.f32 %v2454, %v2465
        %v2483 = vmul.f32 %v2455, %v2465
        %v2484 = vmul.f32 %v2456, %v2470
        %v2485 = vmul.f32 %v2457, %v2470
        %v2486 = vmul.f32 %v2458, %v2475
        %v2487 = vmul.f32 %v2459, %v2475
        %v2488 = vmul.f32 %v2460, %v2480
        %v2489 = vmul.f32 %v2461, %v2480
        %2490 = vst [vmem:[%s257] sm:$0xff] %v2482
        %2491 = vst [vmem:[%s257 + $0x8] sm:$0xff] %v2483
        %2492 = vst [vmem:[%s257 + $0x10] sm:$0xff] %v2484
        %2493 = vst [vmem:[%s257 + $0x18] sm:$0xff] %v2485
        %2494 = vst [vmem:[%s257 + $0x20] sm:$0xff] %v2486
        %2495 = vst [vmem:[%s257 + $0x28] sm:$0xff] %v2487
        %2496 = vst [vmem:[%s257 + $0x30] sm:$0xff] %v2488
        %2497 = vst [vmem:[%s257 + $0x38] sm:$0xff] %v2489
        %s2498 = sand.u32 %s141, 1
        %s2499 = scalar_lea.sflag [#allocation4], %s2498
        %s2500 = sand.u32 %s141, 1
        %s2501 = smul.addr %s2500, 64
        %s2502 = scalar_lea.vmem [#allocation7], %s2501
        // Predicated region
        $region49: #{tpu_custom_call.1} parent=39 // pred_check
          %p2503 = pneg %p151
        $region50: #{tpu_custom_call.1} parent=39 // pred_check_branch
          %2505 = sbr.rel (%p2503) target = $region52
        $region51: #{tpu_custom_call.1} parent=39 // pred_region
          %s2507 = ssub.s32 1024, 1024
          %2508 = vsyncadd %s2499, %s2507
          %s2509 = smul.addr %s23, 8
          %s2510 = smul.addr %s2509, 128
          %s2511 = scalar_lea.hbm %s5, %s2510
          %s2512 = sshll.u32 %s2502, 4
          %s2513 = int_to_ptr.vmem [resolvable:$true] %s2512
          %2518 = dma.vmem_to_hbm [thread:$0]  %s2513, 1024, %s2511, %s2499, 256, 256, 16
        $region52: #{tpu_custom_call.1} parent=39 // pred_fallthru
          _
      $region40: #{tpu_custom_call.1} parent=5 // pred_fallthru
        _
      %p2519 = scmp.le.s32.totalorder 2, %s18
      // Predicated region
      $region53: #{tpu_custom_call.1} parent=5 // pred_check
        %p2520 = pneg %p2519
      $region54: #{tpu_custom_call.1} parent=5 // pred_check_branch
        %2522 = sbr.rel (%p2520) target = $region56
      $region55: #{tpu_custom_call.1} parent=5 // pred_region
        %s2523 = ssub.s32 %s18, 2
        // Predicated region
        $region57: #{tpu_custom_call.1} parent=55 // pred_check
          %p2524 = pneg %p157
        $region58: #{tpu_custom_call.1} parent=55 // pred_check_branch
          %2526 = sbr.rel (%p2524) target = $region60
        $region59: #{tpu_custom_call.1} parent=55 // pred_region
          %s2527 = sand.u32 %s142, 1
          %s2528 = scalar_lea.sflag [#allocation4], %s2527
          %s2529 = sand.u32 %s142, 1
          %s2530 = smul.addr %s2529, 64
          %s2531 = scalar_lea.vmem [#allocation7], %s2530
          %2532 = dma.done %s2528, 1024
        $region60: #{tpu_custom_call.1} parent=55 // pred_fallthru
          _
      $region56: #{tpu_custom_call.1} parent=5 // pred_fallthru
        _
    $region6: #{tpu_custom_call.1} parent=1 // loop_footer
      %s22 = sadd.s32 1, %s18
    $region7: #{tpu_custom_call.1} parent=1 // loop_footer_branch
      %17 = sbr.rel target = $region3
    $region8: #{tpu_custom_call.1} parent=1 // loop_exit
      _
    %2533 = vsyncpa [#allocation3], 1
    %s2534 = scalar_lea.sflag [#allocation3], 1
    %2535 = vsyncpa %s2534, 1
    %2536 = vsyncpa [#allocation6], 1
    %2537 = vsyncpa [#allocation4], 1
    %s2538 = scalar_lea.sflag [#allocation4], 1
    %2539 = vsyncpa %s2538, 1

</llo_original>
